<compile_context>
chip_gen: v7x
topology: tpu7x:2x2x1
jax: 0.10.0
libtpu: 0.0.40
codegen_flags: <defaults>
</compile_context>

<pallas_src>
import jax
import jax.numpy as jnp
from jax.experimental import pallas as pl
from jax.experimental.pallas import tpu as pltpu

LANE = 128    # lane width: OC / NCLS padded to this so outputs are lane-dense
TILE_B = 8    # images per grid step -> full (8,128) vreg / MXU-row utilization


def _round_up(n, m):
    return (n + m - 1) // m * m


# ------------------------------ Pallas kernel --------------------------------


def fused_conv_pool_fc_kernel(patches_ref, conv_w_ref, conv_b_ref, pool_ref,
                              fc_w_ref, fc_b_ref, out_ref):
    """conv(3x3 as matmul)+bias+ReLU -> GAP (ones-contraction) -> linear, fused.

    Grid = (num_batch_tiles,), fully "parallel" (no reduction axis).

    patches_ref: (TILE_B*HW, K)       im2col patches for TILE_B whole images
    conv_w_ref:  (K, OC_P)            conv weights (OC zero-padded), VMEM-resident
    conv_b_ref:  (1, OC_P)
    pool_ref:    (TILE_B, TILE_B*HW)  block-diagonal ones (per-image spatial sum)
    fc_w_ref:    (OC_P, NCLS_P)       classifier weights, 1/HW pre-folded in
    fc_b_ref:    (1, NCLS_P)
    out_ref:     (TILE_B, NCLS_P)     logits for this batch tile (lane-dense)
    """
    # Conv lowered to a single MXU matmul over the whole batch tile, f32 acc,
    # fused bias + ReLU.
    h = jnp.dot(patches_ref[...], conv_w_ref[...],
                preferred_element_type=jnp.float32)
    h = jnp.maximum(h + conv_b_ref[...], 0.0)            # (TILE_B*HW, OC_P)

    # Global-average-pool: per-image spatial sum via an MXU block-diagonal-ones
    # contraction (keeps the XLU free); the 1/HW scale is folded into fc_w.
    pooled = jnp.dot(pool_ref[...], h,
                     preferred_element_type=jnp.float32)  # (TILE_B, OC_P)

    # Classifier matmul + bias, one MXU op for all TILE_B images.
    logits = jnp.dot(pooled, fc_w_ref[...],
                     preferred_element_type=jnp.float32) + fc_b_ref[...]
    out_ref[...] = logits.astype(out_ref.dtype)           # (TILE_B, NCLS_P)


# ------------------------------ JAX wrapper -----------------------------------


def _im2col_3x3_same(x_nhwc):
    """Extract 3x3 'same' padded patches. Returns (B, H, W, 9*C)."""
    B, H, W, C = x_nhwc.shape
    xp = jnp.pad(x_nhwc, ((0, 0), (1, 1), (1, 1), (0, 0)))
    slices = [xp[:, dh:dh + H, dw:dw + W, :]
              for dh in range(3) for dw in range(3)]
    return jnp.concatenate(slices, axis=-1)


@jax.jit
def deep_classifier_forward(x_nchw, conv_w, conv_b, fc_w, fc_b):
    """DeepClassifier(net).forward with net = Conv3x3 + ReLU + GAP + Linear.

    x_nchw: (B, C, H, W) f32 (PyTorch layout)
    conv_w: (9*C, OC)    conv kernel in matmul form
    conv_b: (1, OC)
    fc_w:   (OC, NCLS)
    fc_b:   (1, NCLS)
    returns logits (B, NCLS)
    """
    B, C, H, W = x_nchw.shape
    K = 9 * C
    OC = conv_w.shape[1]
    NCLS = fc_w.shape[1]
    HW = H * W

    # Output dims padded to lane width (unmasked vst); K deliberately NOT padded
    # (last block dim == full array dim is legal, and padding K would inflate the
    # dominant streamed operand by K_P/K).
    OC_P = _round_up(OC, LANE)
    NCLS_P = _round_up(NCLS, LANE)

    # Batch padded to a whole number of TILE_B-image tiles.  (At real batch sizes
    # pad to a multiple of 2*TILE_B so v7x's two TensorCores get equal work.)
    B_P = _round_up(B, TILE_B)
    NB = B_P // TILE_B
    ROWS = TILE_B * HW            # rows per grid step; always a multiple of 8

    # NCHW -> NHWC, im2col in XLA (cheap at these shapes; at real H/W/C move it
    # in-kernel as 9 shifted matmuls to cut streamed bytes ~9x).
    x_nhwc = jnp.transpose(x_nchw, (0, 2, 3, 1))
    patches = _im2col_3x3_same(x_nhwc).reshape(B * HW, K)
    patches = jnp.pad(patches, ((0, (B_P - B) * HW), (0, 0)))   # (B_P*HW, K)

    # Parameters: pad OC/NCLS only; padded rows/cols are exactly zero so the
    # visible logits are unchanged (sliced back at the end).  The 1/HW GAP scale
    # is folded into the classifier weights.
    conv_w_p = jnp.pad(conv_w, ((0, 0), (0, OC_P - OC)))
    conv_b_p = jnp.pad(conv_b, ((0, 0), (0, OC_P - OC)))
    fc_w_p = jnp.pad(fc_w * (1.0 / HW), ((0, OC_P - OC), (0, NCLS_P - NCLS)))
    fc_b_p = jnp.pad(fc_b, ((0, 0), (0, NCLS_P - NCLS)))

    # Block-diagonal ones: pool_mat[b, r] = 1 iff row r belongs to image b.
    row_img = jnp.arange(ROWS, dtype=jnp.int32) // HW
    pool_mat = (row_img[None, :] == jnp.arange(TILE_B, dtype=jnp.int32)[:, None]
                ).astype(jnp.float32)                            # (TILE_B, ROWS)

    logits_p = pl.pallas_call(
        fused_conv_pool_fc_kernel,
        out_shape=jax.ShapeDtypeStruct((B_P, NCLS_P), jnp.float32),
        grid_spec=pltpu.PrefetchScalarGridSpec(
            num_scalar_prefetch=0,
            grid=(NB,),
            in_specs=[
                # One batch-tile of im2col rows per step (pipelined by BlockSpec).
                pl.BlockSpec((ROWS, K), lambda i: (i, 0)),
                # Weights / biases / pool matrix: constant block index ->
                # fetched once, VMEM-resident across the grid.
                pl.BlockSpec((K, OC_P), lambda i: (0, 0)),
                pl.BlockSpec((1, OC_P), lambda i: (0, 0)),
                pl.BlockSpec((TILE_B, ROWS), lambda i: (0, 0)),
                pl.BlockSpec((OC_P, NCLS_P), lambda i: (0, 0)),
                pl.BlockSpec((1, NCLS_P), lambda i: (0, 0)),
            ],
            out_specs=pl.BlockSpec((TILE_B, NCLS_P), lambda i: (i, 0)),
        ),
        compiler_params=pltpu.CompilerParams(
            dimension_semantics=("parallel",)),
    )(patches, conv_w_p, conv_b_p, pool_mat, fc_w_p, fc_b_p)

    return logits_p[:B, :NCLS]


# ----------------------------------- main -------------------------------------

if __name__ == "__main__":
    # Small shapes consistent with a conv classifier forward pass.
    B, C, H, W = 2, 4, 16, 16
    OC = 8        # conv output channels
    NCLS = 10     # number of classes

    key = jax.random.PRNGKey(0)
    k_x, k_cw, k_cb, k_fw, k_fb = jax.random.split(key, 5)

    x = jax.random.normal(k_x, (B, C, H, W), dtype=jnp.float32)

    # Deterministic synthetic parameters (matmul-form conv weights).
    conv_w = 0.1 * jax.random.normal(k_cw, (9 * C, OC), dtype=jnp.float32)
    conv_b = 0.1 * jax.random.normal(k_cb, (1, OC), dtype=jnp.float32)
    fc_w = 0.1 * jax.random.normal(k_fw, (OC, NCLS), dtype=jnp.float32)
    fc_b = 0.1 * jax.random.normal(k_fb, (1, NCLS), dtype=jnp.float32)

    logits = deep_classifier_forward(x, conv_w, conv_b, fc_w, fc_b)
    jax.block_until_ready(logits)

    # Reference check in plain JAX (same math) to validate the fused kernel.
    x_nhwc = jnp.transpose(x, (0, 2, 3, 1))
    patches = _im2col_3x3_same(x_nhwc).reshape(B * H * W, 9 * C)
    h_ref = jnp.maximum(patches @ conv_w + conv_b, 0.0).reshape(B, H * W, OC)
    ref = h_ref.mean(axis=1) @ fc_w + fc_b
    assert jnp.allclose(logits, ref, atol=1e-4, rtol=1e-4)

    # TODO(synk): DeepClassifier.save()/load() (torch.save / state_dict) have no
    # Pallas equivalent; parameters are generated in-script instead.
    print("KERNEL_OK")
</pallas_src>

<mosaic_0001>
module attributes {stable_mosaic.version = 11 : i64} {
  func.func @fused_conv_pool_fc_kernel(%arg0: i32, %arg1: memref<2048x36xf32, #tpu.memory_space<vmem>>, %arg2: memref<36x128xf32, #tpu.memory_space<vmem>>, %arg3: memref<1x128xf32, #tpu.memory_space<vmem>>, %arg4: memref<8x2048xf32, #tpu.memory_space<vmem>>, %arg5: memref<128x128xf32, #tpu.memory_space<vmem>>, %arg6: memref<1x128xf32, #tpu.memory_space<vmem>>, %arg7: memref<8x128xf32, #tpu.memory_space<vmem>>) attributes {dimension_semantics = [#tpu.dimension_semantics<parallel>], iteration_bounds = array<i64: 1>, scalar_prefetch = 0 : i64, scratch_operands = 0 : i64, tpu.core_type = #tpu.core_type<tc>, window_params = [{transform_indices = @transform_0, window_bounds = array<i64: 2048, 36>}, {pipeline_mode = #tpu.pipeline_mode<synchronous>, transform_indices = @transform_1, window_bounds = array<i64: 36, 128>}, {pipeline_mode = #tpu.pipeline_mode<synchronous>, transform_indices = @transform_2, window_bounds = array<i64: 1, 128>}, {pipeline_mode = #tpu.pipeline_mode<synchronous>, transform_indices = @transform_3, window_bounds = array<i64: 8, 2048>}, {pipeline_mode = #tpu.pipeline_mode<synchronous>, transform_indices = @transform_4, window_bounds = array<i64: 128, 128>}, {pipeline_mode = #tpu.pipeline_mode<synchronous>, transform_indices = @transform_5, window_bounds = array<i64: 1, 128>}, {transform_indices = @transform_6, window_bounds = array<i64: 8, 128>}]} {
    %c0 = arith.constant 0 : index
    %c0_0 = arith.constant 0 : index
    %0 = vector.load %arg1[%c0, %c0_0] : memref<2048x36xf32, #tpu.memory_space<vmem>>, vector<2048x36xf32>
    %c0_1 = arith.constant 0 : index
    %c0_2 = arith.constant 0 : index
    %1 = vector.load %arg2[%c0_1, %c0_2] : memref<36x128xf32, #tpu.memory_space<vmem>>, vector<36x128xf32>
    %cst = arith.constant dense<0.000000e+00> : vector<2048x128xf32>
    %2 = tpu.matmul %0, %1, %cst {dimension_numbers = #tpu.dot_dimension_numbers<[1], [0], [0], [1], [0, 0, 1, 1], [], []>} : vector<2048x36xf32>, vector<36x128xf32>, vector<2048x128xf32> -> vector<2048x128xf32>
    %c0_3 = arith.constant 0 : index
    %c0_4 = arith.constant 0 : index
    %3 = vector.load %arg3[%c0_3, %c0_4] : memref<1x128xf32, #tpu.memory_space<vmem>>, vector<1x128xf32>
    %4 = vector.broadcast %3 : vector<1x128xf32> to vector<2048x128xf32>
    %5 = arith.addf %2, %4 : vector<2048x128xf32>
    %cst_5 = arith.constant 0.000000e+00 : f32
    %6 = vector.broadcast %cst_5 : f32 to vector<2048x128xf32>
    %7 = arith.maximumf %5, %6 : vector<2048x128xf32>
    %c0_6 = arith.constant 0 : index
    %c0_7 = arith.constant 0 : index
    %8 = vector.load %arg4[%c0_6, %c0_7] : memref<8x2048xf32, #tpu.memory_space<vmem>>, vector<8x2048xf32>
    %cst_8 = arith.constant dense<0.000000e+00> : vector<8x128xf32>
    %9 = tpu.matmul %8, %7, %cst_8 {dimension_numbers = #tpu.dot_dimension_numbers<[1], [0], [0], [1], [0, 0, 1, 1], [], []>} : vector<8x2048xf32>, vector<2048x128xf32>, vector<8x128xf32> -> vector<8x128xf32>
    %c0_9 = arith.constant 0 : index
    %c0_10 = arith.constant 0 : index
    %10 = vector.load %arg5[%c0_9, %c0_10] : memref<128x128xf32, #tpu.memory_space<vmem>>, vector<128x128xf32>
    %cst_11 = arith.constant dense<0.000000e+00> : vector<8x128xf32>
    %11 = tpu.matmul %9, %10, %cst_11 {dimension_numbers = #tpu.dot_dimension_numbers<[1], [0], [0], [1], [0, 0, 1, 1], [], []>} : vector<8x128xf32>, vector<128x128xf32>, vector<8x128xf32> -> vector<8x128xf32>
    %c0_12 = arith.constant 0 : index
    %c0_13 = arith.constant 0 : index
    %12 = vector.load %arg6[%c0_12, %c0_13] : memref<1x128xf32, #tpu.memory_space<vmem>>, vector<1x128xf32>
    %13 = vector.broadcast %12 : vector<1x128xf32> to vector<8x128xf32>
    %14 = arith.addf %11, %13 : vector<8x128xf32>
    %c0_14 = arith.constant 0 : index
    %c0_15 = arith.constant 0 : index
    %15 = vector.load %arg7[%c0_14, %c0_15] : memref<8x128xf32, #tpu.memory_space<vmem>>, vector<8x128xf32>
    tpu.vector_store %arg7[%c0_14, %c0_15], %14 {strides = array<i32>} : memref<8x128xf32, #tpu.memory_space<vmem>>, vector<8x128xf32>,
    return
  }
  func.func @transform_0(%arg0: i32) -> (i32, i32) {
    %c0_i32 = arith.constant 0 : i32
    %c0_i32_0 = arith.constant 0 : i32
    return %arg0, %c0_i32 : i32, i32
  }
  func.func @transform_1(%arg0: i32) -> (i32, i32) {
    %c0_i32 = arith.constant 0 : i32
    %c0_i32_0 = arith.constant 0 : i32
    %c0_i32_1 = arith.constant 0 : i32
    return %c0_i32, %c0_i32_0 : i32, i32
  }
  func.func @transform_2(%arg0: i32) -> (i32, i32) {
    %c0_i32 = arith.constant 0 : i32
    %c0_i32_0 = arith.constant 0 : i32
    %c0_i32_1 = arith.constant 0 : i32
    return %c0_i32, %c0_i32_0 : i32, i32
  }
  func.func @transform_3(%arg0: i32) -> (i32, i32) {
    %c0_i32 = arith.constant 0 : i32
    %c0_i32_0 = arith.constant 0 : i32
    %c0_i32_1 = arith.constant 0 : i32
    return %c0_i32, %c0_i32_0 : i32, i32
  }
  func.func @transform_4(%arg0: i32) -> (i32, i32) {
    %c0_i32 = arith.constant 0 : i32
    %c0_i32_0 = arith.constant 0 : i32
    %c0_i32_1 = arith.constant 0 : i32
    return %c0_i32, %c0_i32_0 : i32, i32
  }
  func.func @transform_5(%arg0: i32) -> (i32, i32) {
    %c0_i32 = arith.constant 0 : i32
    %c0_i32_0 = arith.constant 0 : i32
    %c0_i32_1 = arith.constant 0 : i32
    return %c0_i32, %c0_i32_0 : i32, i32
  }
  func.func @transform_6(%arg0: i32) -> (i32, i32) {
    %c0_i32 = arith.constant 0 : i32
    %c0_i32_0 = arith.constant 0 : i32
    return %arg0, %c0_i32 : i32, i32
  }
}

</mosaic_0001>

<llo_original>
// kernel: deep_classifier_forward.1
$region0: #{deep_classifier_forward.1}
  #allocation0 [shape = 'u32[]', space=smem, size = 0x4, offset = 0x4, fixed_abs, tag = 'smem constant byte address 0x4 - core index']
  #allocation1 [shape = 'u32[144,128]{1,0:T(1,128)}', space=vmem, size = 0x12000, scoped, tag = 'internal scratch']
  %s0 = inlined_call_operand.vmem [shape: f32[2048,36], index: 0, kind: input, shape index: {}]
  %s1 = inlined_call_operand.vmem [shape: f32[36,128], index: 1, kind: input, shape index: {}]
  %s2 = inlined_call_operand.vmem [shape: f32[1,128], index: 2, kind: input, shape index: {}]
  %s3 = inlined_call_operand.vmem [shape: f32[8,2048], index: 3, kind: input, shape index: {}]
  %s4 = inlined_call_operand.vmem [shape: f32[128,128], index: 4, kind: input, shape index: {}]
  %s5 = inlined_call_operand.vmem [shape: f32[1,128], index: 5, kind: input, shape index: {}]
  %s6 = inlined_call_operand.vmem [shape: f32[8,128], index: 6, kind: output, shape index: {}]
  %s7 = sld [smem:[#allocation0]]
  $region34: #{deep_classifier_forward.1} parent=0
    _
  %s9 = ssub.s32 1, %s7
  %s10 = scalar_select 0, %s9, %s7
  // Predicated region
  $region2: #{deep_classifier_forward.1} parent=0 // pred_check
    _
  $region3: #{deep_classifier_forward.1} parent=0 // pred_check_branch
    %12 = sbr.rel (0) target = $region5
  $region4: #{deep_classifier_forward.1} parent=0 // pred_region
    _
  $region5: #{deep_classifier_forward.1} parent=0 // pred_fallthru
    _
  // Predicated region
  $region6: #{deep_classifier_forward.1} parent=0 // pred_check
    _
  $region7: #{deep_classifier_forward.1} parent=0 // pred_check_branch
    %14 = sbr.rel (0) target = $region9
  $region8: #{deep_classifier_forward.1} parent=0 // pred_region
    _
  $region9: #{deep_classifier_forward.1} parent=0 // pred_fallthru
    _
  // Predicated region
  $region10: #{deep_classifier_forward.1} parent=0 // pred_check
    _
  $region11: #{deep_classifier_forward.1} parent=0 // pred_check_branch
    %16 = sbr.rel (0) target = $region13
  $region12: #{deep_classifier_forward.1} parent=0 // pred_region
    _
  $region13: #{deep_classifier_forward.1} parent=0 // pred_fallthru
    _
  // Predicated region
  $region14: #{deep_classifier_forward.1} parent=0 // pred_check
    _
  $region15: #{deep_classifier_forward.1} parent=0 // pred_check_branch
    %18 = sbr.rel (0) target = $region17
  $region16: #{deep_classifier_forward.1} parent=0 // pred_region
    _
  $region17: #{deep_classifier_forward.1} parent=0 // pred_fallthru
    _
  // Predicated region
  $region18: #{deep_classifier_forward.1} parent=0 // pred_check
    _
  $region19: #{deep_classifier_forward.1} parent=0 // pred_check_branch
    %20 = sbr.rel (0) target = $region21
  $region20: #{deep_classifier_forward.1} parent=0 // pred_region
    _
  $region21: #{deep_classifier_forward.1} parent=0 // pred_fallthru
    _
  // Predicated region
  $region22: #{deep_classifier_forward.1} parent=0 // pred_check
    _
  $region23: #{deep_classifier_forward.1} parent=0 // pred_check_branch
    %22 = sbr.rel (0) target = $region25
  $region24: #{deep_classifier_forward.1} parent=0 // pred_region
    _
  $region25: #{deep_classifier_forward.1} parent=0 // pred_fallthru
    _
  %v23 = vld [vmem:[%s0] sm:$0xff]
  %v24 = vld [vmem:[%s0 + $0x8] sm:$0xff]
  %v25 = vld [vmem:[%s0 + $0x10] sm:$0xff]
  %v26 = vld [vmem:[%s0 + $0x18] sm:$0xff]
  %v27 = vld [vmem:[%s0 + $0x20] sm:$0xff]
  %v28 = vld [vmem:[%s0 + $0x28] sm:$0xff]
  %v29 = vld [vmem:[%s0 + $0x30] sm:$0xff]
  %v30 = vld [vmem:[%s0 + $0x38] sm:$0xff]
  %v31 = vld [vmem:[%s0 + $0x40] sm:$0xff]
  %v32 = vld [vmem:[%s0 + $0x48] sm:$0xff]
  %v33 = vld [vmem:[%s0 + $0x50] sm:$0xff]
  %v34 = vld [vmem:[%s0 + $0x58] sm:$0xff]
  %v35 = vld [vmem:[%s0 + $0x60] sm:$0xff]
  %v36 = vld [vmem:[%s0 + $0x68] sm:$0xff]
  %v37 = vld [vmem:[%s0 + $0x70] sm:$0xff]
  %v38 = vld [vmem:[%s0 + $0x78] sm:$0xff]
  %v39 = vld [vmem:[%s0 + $0x80] sm:$0xff]
  %v40 = vld [vmem:[%s0 + $0x88] sm:$0xff]
  %v41 = vld [vmem:[%s0 + $0x90] sm:$0xff]
  %v42 = vld [vmem:[%s0 + $0x98] sm:$0xff]
  %v43 = vld [vmem:[%s0 + $0xa0] sm:$0xff]
  %v44 = vld [vmem:[%s0 + $0xa8] sm:$0xff]
  %v45 = vld [vmem:[%s0 + $0xb0] sm:$0xff]
  %v46 = vld [vmem:[%s0 + $0xb8] sm:$0xff]
  %v47 = vld [vmem:[%s0 + $0xc0] sm:$0xff]
  %v48 = vld [vmem:[%s0 + $0xc8] sm:$0xff]
  %v49 = vld [vmem:[%s0 + $0xd0] sm:$0xff]
  %v50 = vld [vmem:[%s0 + $0xd8] sm:$0xff]
  %v51 = vld [vmem:[%s0 + $0xe0] sm:$0xff]
  %v52 = vld [vmem:[%s0 + $0xe8] sm:$0xff]
  %v53 = vld [vmem:[%s0 + $0xf0] sm:$0xff]
  %v54 = vld [vmem:[%s0 + $0xf8] sm:$0xff]
  %v55 = vld [vmem:[%s0 + $0x100] sm:$0xff]
  %v56 = vld [vmem:[%s0 + $0x108] sm:$0xff]
  %v57 = vld [vmem:[%s0 + $0x110] sm:$0xff]
  %v58 = vld [vmem:[%s0 + $0x118] sm:$0xff]
  %v59 = vld [vmem:[%s0 + $0x120] sm:$0xff]
  %v60 = vld [vmem:[%s0 + $0x128] sm:$0xff]
  %v61 = vld [vmem:[%s0 + $0x130] sm:$0xff]
  %v62 = vld [vmem:[%s0 + $0x138] sm:$0xff]
  %v63 = vld [vmem:[%s0 + $0x140] sm:$0xff]
  %v64 = vld [vmem:[%s0 + $0x148] sm:$0xff]
  %v65 = vld [vmem:[%s0 + $0x150] sm:$0xff]
  %v66 = vld [vmem:[%s0 + $0x158] sm:$0xff]
  %v67 = vld [vmem:[%s0 + $0x160] sm:$0xff]
  %v68 = vld [vmem:[%s0 + $0x168] sm:$0xff]
  %v69 = vld [vmem:[%s0 + $0x170] sm:$0xff]
  %v70 = vld [vmem:[%s0 + $0x178] sm:$0xff]
  %v71 = vld [vmem:[%s0 + $0x180] sm:$0xff]
  %v72 = vld [vmem:[%s0 + $0x188] sm:$0xff]
  %v73 = vld [vmem:[%s0 + $0x190] sm:$0xff]
  %v74 = vld [vmem:[%s0 + $0x198] sm:$0xff]
  %v75 = vld [vmem:[%s0 + $0x1a0] sm:$0xff]
  %v76 = vld [vmem:[%s0 + $0x1a8] sm:$0xff]
  %v77 = vld [vmem:[%s0 + $0x1b0] sm:$0xff]
  %v78 = vld [vmem:[%s0 + $0x1b8] sm:$0xff]
  %v79 = vld [vmem:[%s0 + $0x1c0] sm:$0xff]
  %v80 = vld [vmem:[%s0 + $0x1c8] sm:$0xff]
  %v81 = vld [vmem:[%s0 + $0x1d0] sm:$0xff]
  %v82 = vld [vmem:[%s0 + $0x1d8] sm:$0xff]
  %v83 = vld [vmem:[%s0 + $0x1e0] sm:$0xff]
  %v84 = vld [vmem:[%s0 + $0x1e8] sm:$0xff]
  %v85 = vld [vmem:[%s0 + $0x1f0] sm:$0xff]
  %v86 = vld [vmem:[%s0 + $0x1f8] sm:$0xff]
  %v87 = vld [vmem:[%s0 + $0x200] sm:$0xff]
  %v88 = vld [vmem:[%s0 + $0x208] sm:$0xff]
  %v89 = vld [vmem:[%s0 + $0x210] sm:$0xff]
  %v90 = vld [vmem:[%s0 + $0x218] sm:$0xff]
  %v91 = vld [vmem:[%s0 + $0x220] sm:$0xff]
  %v92 = vld [vmem:[%s0 + $0x228] sm:$0xff]
  %v93 = vld [vmem:[%s0 + $0x230] sm:$0xff]
  %v94 = vld [vmem:[%s0 + $0x238] sm:$0xff]
  %v95 = vld [vmem:[%s0 + $0x240] sm:$0xff]
  %v96 = vld [vmem:[%s0 + $0x248] sm:$0xff]
  %v97 = vld [vmem:[%s0 + $0x250] sm:$0xff]
  %v98 = vld [vmem:[%s0 + $0x258] sm:$0xff]
  %v99 = vld [vmem:[%s0 + $0x260] sm:$0xff]
  %v100 = vld [vmem:[%s0 + $0x268] sm:$0xff]
  %v101 = vld [vmem:[%s0 + $0x270] sm:$0xff]
  %v102 = vld [vmem:[%s0 + $0x278] sm:$0xff]
  %v103 = vld [vmem:[%s0 + $0x280] sm:$0xff]
  %v104 = vld [vmem:[%s0 + $0x288] sm:$0xff]
  %v105 = vld [vmem:[%s0 + $0x290] sm:$0xff]
  %v106 = vld [vmem:[%s0 + $0x298] sm:$0xff]
  %v107 = vld [vmem:[%s0 + $0x2a0] sm:$0xff]
  %v108 = vld [vmem:[%s0 + $0x2a8] sm:$0xff]
  %v109 = vld [vmem:[%s0 + $0x2b0] sm:$0xff]
  %v110 = vld [vmem:[%s0 + $0x2b8] sm:$0xff]
  %v111 = vld [vmem:[%s0 + $0x2c0] sm:$0xff]
  %v112 = vld [vmem:[%s0 + $0x2c8] sm:$0xff]
  %v113 = vld [vmem:[%s0 + $0x2d0] sm:$0xff]
  %v114 = vld [vmem:[%s0 + $0x2d8] sm:$0xff]
  %v115 = vld [vmem:[%s0 + $0x2e0] sm:$0xff]
  %v116 = vld [vmem:[%s0 + $0x2e8] sm:$0xff]
  %v117 = vld [vmem:[%s0 + $0x2f0] sm:$0xff]
  %v118 = vld [vmem:[%s0 + $0x2f8] sm:$0xff]
  %v119 = vld [vmem:[%s0 + $0x300] sm:$0xff]
  %v120 = vld [vmem:[%s0 + $0x308] sm:$0xff]
  %v121 = vld [vmem:[%s0 + $0x310] sm:$0xff]
  %v122 = vld [vmem:[%s0 + $0x318] sm:$0xff]
  %v123 = vld [vmem:[%s0 + $0x320] sm:$0xff]
  %v124 = vld [vmem:[%s0 + $0x328] sm:$0xff]
  %v125 = vld [vmem:[%s0 + $0x330] sm:$0xff]
  %v126 = vld [vmem:[%s0 + $0x338] sm:$0xff]
  %v127 = vld [vmem:[%s0 + $0x340] sm:$0xff]
  %v128 = vld [vmem:[%s0 + $0x348] sm:$0xff]
  %v129 = vld [vmem:[%s0 + $0x350] sm:$0xff]
  %v130 = vld [vmem:[%s0 + $0x358] sm:$0xff]
  %v131 = vld [vmem:[%s0 + $0x360] sm:$0xff]
  %v132 = vld [vmem:[%s0 + $0x368] sm:$0xff]
  %v133 = vld [vmem:[%s0 + $0x370] sm:$0xff]
  %v134 = vld [vmem:[%s0 + $0x378] sm:$0xff]
  %v135 = vld [vmem:[%s0 + $0x380] sm:$0xff]
  %v136 = vld [vmem:[%s0 + $0x388] sm:$0xff]
  %v137 = vld [vmem:[%s0 + $0x390] sm:$0xff]
  %v138 = vld [vmem:[%s0 + $0x398] sm:$0xff]
  %v139 = vld [vmem:[%s0 + $0x3a0] sm:$0xff]
  %v140 = vld [vmem:[%s0 + $0x3a8] sm:$0xff]
  %v141 = vld [vmem:[%s0 + $0x3b0] sm:$0xff]
  %v142 = vld [vmem:[%s0 + $0x3b8] sm:$0xff]
  %v143 = vld [vmem:[%s0 + $0x3c0] sm:$0xff]
  %v144 = vld [vmem:[%s0 + $0x3c8] sm:$0xff]
  %v145 = vld [vmem:[%s0 + $0x3d0] sm:$0xff]
  %v146 = vld [vmem:[%s0 + $0x3d8] sm:$0xff]
  %v147 = vld [vmem:[%s0 + $0x3e0] sm:$0xff]
  %v148 = vld [vmem:[%s0 + $0x3e8] sm:$0xff]
  %v149 = vld [vmem:[%s0 + $0x3f0] sm:$0xff]
  %v150 = vld [vmem:[%s0 + $0x3f8] sm:$0xff]
  %v151 = vld [vmem:[%s0 + $0x400] sm:$0xff]
  %v152 = vld [vmem:[%s0 + $0x408] sm:$0xff]
  %v153 = vld [vmem:[%s0 + $0x410] sm:$0xff]
  %v154 = vld [vmem:[%s0 + $0x418] sm:$0xff]
  %v155 = vld [vmem:[%s0 + $0x420] sm:$0xff]
  %v156 = vld [vmem:[%s0 + $0x428] sm:$0xff]
  %v157 = vld [vmem:[%s0 + $0x430] sm:$0xff]
  %v158 = vld [vmem:[%s0 + $0x438] sm:$0xff]
  %v159 = vld [vmem:[%s0 + $0x440] sm:$0xff]
  %v160 = vld [vmem:[%s0 + $0x448] sm:$0xff]
  %v161 = vld [vmem:[%s0 + $0x450] sm:$0xff]
  %v162 = vld [vmem:[%s0 + $0x458] sm:$0xff]
  %v163 = vld [vmem:[%s0 + $0x460] sm:$0xff]
  %v164 = vld [vmem:[%s0 + $0x468] sm:$0xff]
  %v165 = vld [vmem:[%s0 + $0x470] sm:$0xff]
  %v166 = vld [vmem:[%s0 + $0x478] sm:$0xff]
  %v167 = vld [vmem:[%s0 + $0x480] sm:$0xff]
  %v168 = vld [vmem:[%s0 + $0x488] sm:$0xff]
  %v169 = vld [vmem:[%s0 + $0x490] sm:$0xff]
  %v170 = vld [vmem:[%s0 + $0x498] sm:$0xff]
  %v171 = vld [vmem:[%s0 + $0x4a0] sm:$0xff]
  %v172 = vld [vmem:[%s0 + $0x4a8] sm:$0xff]
  %v173 = vld [vmem:[%s0 + $0x4b0] sm:$0xff]
  %v174 = vld [vmem:[%s0 + $0x4b8] sm:$0xff]
  %v175 = vld [vmem:[%s0 + $0x4c0] sm:$0xff]
  %v176 = vld [vmem:[%s0 + $0x4c8] sm:$0xff]
  %v177 = vld [vmem:[%s0 + $0x4d0] sm:$0xff]
  %v178 = vld [vmem:[%s0 + $0x4d8] sm:$0xff]
  %v179 = vld [vmem:[%s0 + $0x4e0] sm:$0xff]
  %v180 = vld [vmem:[%s0 + $0x4e8] sm:$0xff]
  %v181 = vld [vmem:[%s0 + $0x4f0] sm:$0xff]
  %v182 = vld [vmem:[%s0 + $0x4f8] sm:$0xff]
  %v183 = vld [vmem:[%s0 + $0x500] sm:$0xff]
  %v184 = vld [vmem:[%s0 + $0x508] sm:$0xff]
  %v185 = vld [vmem:[%s0 + $0x510] sm:$0xff]
  %v186 = vld [vmem:[%s0 + $0x518] sm:$0xff]
  %v187 = vld [vmem:[%s0 + $0x520] sm:$0xff]
  %v188 = vld [vmem:[%s0 + $0x528] sm:$0xff]
  %v189 = vld [vmem:[%s0 + $0x530] sm:$0xff]
  %v190 = vld [vmem:[%s0 + $0x538] sm:$0xff]
  %v191 = vld [vmem:[%s0 + $0x540] sm:$0xff]
  %v192 = vld [vmem:[%s0 + $0x548] sm:$0xff]
  %v193 = vld [vmem:[%s0 + $0x550] sm:$0xff]
  %v194 = vld [vmem:[%s0 + $0x558] sm:$0xff]
  %v195 = vld [vmem:[%s0 + $0x560] sm:$0xff]
  %v196 = vld [vmem:[%s0 + $0x568] sm:$0xff]
  %v197 = vld [vmem:[%s0 + $0x570] sm:$0xff]
  %v198 = vld [vmem:[%s0 + $0x578] sm:$0xff]
  %v199 = vld [vmem:[%s0 + $0x580] sm:$0xff]
  %v200 = vld [vmem:[%s0 + $0x588] sm:$0xff]
  %v201 = vld [vmem:[%s0 + $0x590] sm:$0xff]
  %v202 = vld [vmem:[%s0 + $0x598] sm:$0xff]
  %v203 = vld [vmem:[%s0 + $0x5a0] sm:$0xff]
  %v204 = vld [vmem:[%s0 + $0x5a8] sm:$0xff]
  %v205 = vld [vmem:[%s0 + $0x5b0] sm:$0xff]
  %v206 = vld [vmem:[%s0 + $0x5b8] sm:$0xff]
  %v207 = vld [vmem:[%s0 + $0x5c0] sm:$0xff]
  %v208 = vld [vmem:[%s0 + $0x5c8] sm:$0xff]
  %v209 = vld [vmem:[%s0 + $0x5d0] sm:$0xff]
  %v210 = vld [vmem:[%s0 + $0x5d8] sm:$0xff]
  %v211 = vld [vmem:[%s0 + $0x5e0] sm:$0xff]
  %v212 = vld [vmem:[%s0 + $0x5e8] sm:$0xff]
  %v213 = vld [vmem:[%s0 + $0x5f0] sm:$0xff]
  %v214 = vld [vmem:[%s0 + $0x5f8] sm:$0xff]
  %v215 = vld [vmem:[%s0 + $0x600] sm:$0xff]
  %v216 = vld [vmem:[%s0 + $0x608] sm:$0xff]
  %v217 = vld [vmem:[%s0 + $0x610] sm:$0xff]
  %v218 = vld [vmem:[%s0 + $0x618] sm:$0xff]
  %v219 = vld [vmem:[%s0 + $0x620] sm:$0xff]
  %v220 = vld [vmem:[%s0 + $0x628] sm:$0xff]
  %v221 = vld [vmem:[%s0 + $0x630] sm:$0xff]
  %v222 = vld [vmem:[%s0 + $0x638] sm:$0xff]
  %v223 = vld [vmem:[%s0 + $0x640] sm:$0xff]
  %v224 = vld [vmem:[%s0 + $0x648] sm:$0xff]
  %v225 = vld [vmem:[%s0 + $0x650] sm:$0xff]
  %v226 = vld [vmem:[%s0 + $0x658] sm:$0xff]
  %v227 = vld [vmem:[%s0 + $0x660] sm:$0xff]
  %v228 = vld [vmem:[%s0 + $0x668] sm:$0xff]
  %v229 = vld [vmem:[%s0 + $0x670] sm:$0xff]
  %v230 = vld [vmem:[%s0 + $0x678] sm:$0xff]
  %v231 = vld [vmem:[%s0 + $0x680] sm:$0xff]
  %v232 = vld [vmem:[%s0 + $0x688] sm:$0xff]
  %v233 = vld [vmem:[%s0 + $0x690] sm:$0xff]
  %v234 = vld [vmem:[%s0 + $0x698] sm:$0xff]
  %v235 = vld [vmem:[%s0 + $0x6a0] sm:$0xff]
  %v236 = vld [vmem:[%s0 + $0x6a8] sm:$0xff]
  %v237 = vld [vmem:[%s0 + $0x6b0] sm:$0xff]
  %v238 = vld [vmem:[%s0 + $0x6b8] sm:$0xff]
  %v239 = vld [vmem:[%s0 + $0x6c0] sm:$0xff]
  %v240 = vld [vmem:[%s0 + $0x6c8] sm:$0xff]
  %v241 = vld [vmem:[%s0 + $0x6d0] sm:$0xff]
  %v242 = vld [vmem:[%s0 + $0x6d8] sm:$0xff]
  %v243 = vld [vmem:[%s0 + $0x6e0] sm:$0xff]
  %v244 = vld [vmem:[%s0 + $0x6e8] sm:$0xff]
  %v245 = vld [vmem:[%s0 + $0x6f0] sm:$0xff]
  %v246 = vld [vmem:[%s0 + $0x6f8] sm:$0xff]
  %v247 = vld [vmem:[%s0 + $0x700] sm:$0xff]
  %v248 = vld [vmem:[%s0 + $0x708] sm:$0xff]
  %v249 = vld [vmem:[%s0 + $0x710] sm:$0xff]
  %v250 = vld [vmem:[%s0 + $0x718] sm:$0xff]
  %v251 = vld [vmem:[%s0 + $0x720] sm:$0xff]
  %v252 = vld [vmem:[%s0 + $0x728] sm:$0xff]
  %v253 = vld [vmem:[%s0 + $0x730] sm:$0xff]
  %v254 = vld [vmem:[%s0 + $0x738] sm:$0xff]
  %v255 = vld [vmem:[%s0 + $0x740] sm:$0xff]
  %v256 = vld [vmem:[%s0 + $0x748] sm:$0xff]
  %v257 = vld [vmem:[%s0 + $0x750] sm:$0xff]
  %v258 = vld [vmem:[%s0 + $0x758] sm:$0xff]
  %v259 = vld [vmem:[%s0 + $0x760] sm:$0xff]
  %v260 = vld [vmem:[%s0 + $0x768] sm:$0xff]
  %v261 = vld [vmem:[%s0 + $0x770] sm:$0xff]
  %v262 = vld [vmem:[%s0 + $0x778] sm:$0xff]
  %v263 = vld [vmem:[%s0 + $0x780] sm:$0xff]
  %v264 = vld [vmem:[%s0 + $0x788] sm:$0xff]
  %v265 = vld [vmem:[%s0 + $0x790] sm:$0xff]
  %v266 = vld [vmem:[%s0 + $0x798] sm:$0xff]
  %v267 = vld [vmem:[%s0 + $0x7a0] sm:$0xff]
  %v268 = vld [vmem:[%s0 + $0x7a8] sm:$0xff]
  %v269 = vld [vmem:[%s0 + $0x7b0] sm:$0xff]
  %v270 = vld [vmem:[%s0 + $0x7b8] sm:$0xff]
  %v271 = vld [vmem:[%s0 + $0x7c0] sm:$0xff]
  %v272 = vld [vmem:[%s0 + $0x7c8] sm:$0xff]
  %v273 = vld [vmem:[%s0 + $0x7d0] sm:$0xff]
  %v274 = vld [vmem:[%s0 + $0x7d8] sm:$0xff]
  %v275 = vld [vmem:[%s0 + $0x7e0] sm:$0xff]
  %v276 = vld [vmem:[%s0 + $0x7e8] sm:$0xff]
  %v277 = vld [vmem:[%s0 + $0x7f0] sm:$0xff]
  %v278 = vld [vmem:[%s0 + $0x7f8] sm:$0xff]
  %v279 = vld [vmem:[%s1] sm:$0xff]
  %v280 = vld [vmem:[%s1 + $0x8] sm:$0xff]
  %v281 = vld [vmem:[%s1 + $0x10] sm:$0xff]
  %v282 = vld [vmem:[%s1 + $0x18] sm:$0xff]
  %v283 = vld [vmem:[%s1 + $0x20] sm:$0xf]
  %v284 = vld [vmem:[%s2] sm:$0x1]
  %v286 = vlaneseq
  %v287 = vshrl.u32 %v286, 7
  %v288 = vsub.s32 0, %v287
  %v289 = vrot.slane %v284, %v288
  %vm291 = vcmask 293888
  %v293 = vsel %vm291, %v23, 0
  %v296 = vsel %vm291, %v24, 0
  %v299 = vsel %vm291, %v25, 0
  %v302 = vsel %vm291, %v26, 0
  %v305 = vsel %vm291, %v27, 0
  %v308 = vsel %vm291, %v28, 0
  %v311 = vsel %vm291, %v29, 0
  %v314 = vsel %vm291, %v30, 0
  %v317 = vsel %vm291, %v31, 0
  %v320 = vsel %vm291, %v32, 0
  %v323 = vsel %vm291, %v33, 0
  %v326 = vsel %vm291, %v34, 0
  %v329 = vsel %vm291, %v35, 0
  %v332 = vsel %vm291, %v36, 0
  %v335 = vsel %vm291, %v37, 0
  %v338 = vsel %vm291, %v38, 0
  %v341 = vsel %vm291, %v39, 0
  %v344 = vsel %vm291, %v40, 0
  %v347 = vsel %vm291, %v41, 0
  %v350 = vsel %vm291, %v42, 0
  %v353 = vsel %vm291, %v43, 0
  %v356 = vsel %vm291, %v44, 0
  %v359 = vsel %vm291, %v45, 0
  %v362 = vsel %vm291, %v46, 0
  %v365 = vsel %vm291, %v47, 0
  %v368 = vsel %vm291, %v48, 0
  %v371 = vsel %vm291, %v49, 0
  %v374 = vsel %vm291, %v50, 0
  %v377 = vsel %vm291, %v51, 0
  %v380 = vsel %vm291, %v52, 0
  %v383 = vsel %vm291, %v53, 0
  %v386 = vsel %vm291, %v54, 0
  %v389 = vsel %vm291, %v55, 0
  %v392 = vsel %vm291, %v56, 0
  %v395 = vsel %vm291, %v57, 0
  %v398 = vsel %vm291, %v58, 0
  %v401 = vsel %vm291, %v59, 0
  %v404 = vsel %vm291, %v60, 0
  %v407 = vsel %vm291, %v61, 0
  %v410 = vsel %vm291, %v62, 0
  %v413 = vsel %vm291, %v63, 0
  %v416 = vsel %vm291, %v64, 0
  %v419 = vsel %vm291, %v65, 0
  %v422 = vsel %vm291, %v66, 0
  %v425 = vsel %vm291, %v67, 0
  %v428 = vsel %vm291, %v68, 0
  %v431 = vsel %vm291, %v69, 0
  %v434 = vsel %vm291, %v70, 0
  %v437 = vsel %vm291, %v71, 0
  %v440 = vsel %vm291, %v72, 0
  %v443 = vsel %vm291, %v73, 0
  %v446 = vsel %vm291, %v74, 0
  %v449 = vsel %vm291, %v75, 0
  %v452 = vsel %vm291, %v76, 0
  %v455 = vsel %vm291, %v77, 0
  %v458 = vsel %vm291, %v78, 0
  %v461 = vsel %vm291, %v79, 0
  %v464 = vsel %vm291, %v80, 0
  %v467 = vsel %vm291, %v81, 0
  %v470 = vsel %vm291, %v82, 0
  %v473 = vsel %vm291, %v83, 0
  %v476 = vsel %vm291, %v84, 0
  %v479 = vsel %vm291, %v85, 0
  %v482 = vsel %vm291, %v86, 0
  %v485 = vsel %vm291, %v87, 0
  %v488 = vsel %vm291, %v88, 0
  %v491 = vsel %vm291, %v89, 0
  %v494 = vsel %vm291, %v90, 0
  %v497 = vsel %vm291, %v91, 0
  %v500 = vsel %vm291, %v92, 0
  %v503 = vsel %vm291, %v93, 0
  %v506 = vsel %vm291, %v94, 0
  %v509 = vsel %vm291, %v95, 0
  %v512 = vsel %vm291, %v96, 0
  %v515 = vsel %vm291, %v97, 0
  %v518 = vsel %vm291, %v98, 0
  %v521 = vsel %vm291, %v99, 0
  %v524 = vsel %vm291, %v100, 0
  %v527 = vsel %vm291, %v101, 0
  %v530 = vsel %vm291, %v102, 0
  %v533 = vsel %vm291, %v103, 0
  %v536 = vsel %vm291, %v104, 0
  %v539 = vsel %vm291, %v105, 0
  %v542 = vsel %vm291, %v106, 0
  %v545 = vsel %vm291, %v107, 0
  %v548 = vsel %vm291, %v108, 0
  %v551 = vsel %vm291, %v109, 0
  %v554 = vsel %vm291, %v110, 0
  %v557 = vsel %vm291, %v111, 0
  %v560 = vsel %vm291, %v112, 0
  %v563 = vsel %vm291, %v113, 0
  %v566 = vsel %vm291, %v114, 0
  %v569 = vsel %vm291, %v115, 0
  %v572 = vsel %vm291, %v116, 0
  %v575 = vsel %vm291, %v117, 0
  %v578 = vsel %vm291, %v118, 0
  %v581 = vsel %vm291, %v119, 0
  %v584 = vsel %vm291, %v120, 0
  %v587 = vsel %vm291, %v121, 0
  %v590 = vsel %vm291, %v122, 0
  %v593 = vsel %vm291, %v123, 0
  %v596 = vsel %vm291, %v124, 0
  %v599 = vsel %vm291, %v125, 0
  %v602 = vsel %vm291, %v126, 0
  %v605 = vsel %vm291, %v127, 0
  %v608 = vsel %vm291, %v128, 0
  %v611 = vsel %vm291, %v129, 0
  %v614 = vsel %vm291, %v130, 0
  %v617 = vsel %vm291, %v131, 0
  %v620 = vsel %vm291, %v132, 0
  %v623 = vsel %vm291, %v133, 0
  %v626 = vsel %vm291, %v134, 0
  %v629 = vsel %vm291, %v135, 0
  %v632 = vsel %vm291, %v136, 0
  %v635 = vsel %vm291, %v137, 0
  %v638 = vsel %vm291, %v138, 0
  %v641 = vsel %vm291, %v139, 0
  %v644 = vsel %vm291, %v140, 0
  %v647 = vsel %vm291, %v141, 0
  %v650 = vsel %vm291, %v142, 0
  %v653 = vsel %vm291, %v143, 0
  %v656 = vsel %vm291, %v144, 0
  %v659 = vsel %vm291, %v145, 0
  %v662 = vsel %vm291, %v146, 0
  %v665 = vsel %vm291, %v147, 0
  %v668 = vsel %vm291, %v148, 0
  %v671 = vsel %vm291, %v149, 0
  %v674 = vsel %vm291, %v150, 0
  %v677 = vsel %vm291, %v151, 0
  %v680 = vsel %vm291, %v152, 0
  %v683 = vsel %vm291, %v153, 0
  %v686 = vsel %vm291, %v154, 0
  %v689 = vsel %vm291, %v155, 0
  %v692 = vsel %vm291, %v156, 0
  %v695 = vsel %vm291, %v157, 0
  %v698 = vsel %vm291, %v158, 0
  %v701 = vsel %vm291, %v159, 0
  %v704 = vsel %vm291, %v160, 0
  %v707 = vsel %vm291, %v161, 0
  %v710 = vsel %vm291, %v162, 0
  %v713 = vsel %vm291, %v163, 0
  %v716 = vsel %vm291, %v164, 0
  %v719 = vsel %vm291, %v165, 0
  %v722 = vsel %vm291, %v166, 0
  %v725 = vsel %vm291, %v167, 0
  %v728 = vsel %vm291, %v168, 0
  %v731 = vsel %vm291, %v169, 0
  %v734 = vsel %vm291, %v170, 0
  %v737 = vsel %vm291, %v171, 0
  %v740 = vsel %vm291, %v172, 0
  %v743 = vsel %vm291, %v173, 0
  %v746 = vsel %vm291, %v174, 0
  %v749 = vsel %vm291, %v175, 0
  %v752 = vsel %vm291, %v176, 0
  %v755 = vsel %vm291, %v177, 0
  %v758 = vsel %vm291, %v178, 0
  %v761 = vsel %vm291, %v179, 0
  %v764 = vsel %vm291, %v180, 0
  %v767 = vsel %vm291, %v181, 0
  %v770 = vsel %vm291, %v182, 0
  %v773 = vsel %vm291, %v183, 0
  %v776 = vsel %vm291, %v184, 0
  %v779 = vsel %vm291, %v185, 0
  %v782 = vsel %vm291, %v186, 0
  %v785 = vsel %vm291, %v187, 0
  %v788 = vsel %vm291, %v188, 0
  %v791 = vsel %vm291, %v189, 0
  %v794 = vsel %vm291, %v190, 0
  %v797 = vsel %vm291, %v191, 0
  %v800 = vsel %vm291, %v192, 0
  %v803 = vsel %vm291, %v193, 0
  %v806 = vsel %vm291, %v194, 0
  %v809 = vsel %vm291, %v195, 0
  %v812 = vsel %vm291, %v196, 0
  %v815 = vsel %vm291, %v197, 0
  %v818 = vsel %vm291, %v198, 0
  %v821 = vsel %vm291, %v199, 0
  %v824 = vsel %vm291, %v200, 0
  %v827 = vsel %vm291, %v201, 0
  %v830 = vsel %vm291, %v202, 0
  %v833 = vsel %vm291, %v203, 0
  %v836 = vsel %vm291, %v204, 0
  %v839 = vsel %vm291, %v205, 0
  %v842 = vsel %vm291, %v206, 0
  %v845 = vsel %vm291, %v207, 0
  %v848 = vsel %vm291, %v208, 0
  %v851 = vsel %vm291, %v209, 0
  %v854 = vsel %vm291, %v210, 0
  %v857 = vsel %vm291, %v211, 0
  %v860 = vsel %vm291, %v212, 0
  %v863 = vsel %vm291, %v213, 0
  %v866 = vsel %vm291, %v214, 0
  %v869 = vsel %vm291, %v215, 0
  %v872 = vsel %vm291, %v216, 0
  %v875 = vsel %vm291, %v217, 0
  %v878 = vsel %vm291, %v218, 0
  %v881 = vsel %vm291, %v219, 0
  %v884 = vsel %vm291, %v220, 0
  %v887 = vsel %vm291, %v221, 0
  %v890 = vsel %vm291, %v222, 0
  %v893 = vsel %vm291, %v223, 0
  %v896 = vsel %vm291, %v224, 0
  %v899 = vsel %vm291, %v225, 0
  %v902 = vsel %vm291, %v226, 0
  %v905 = vsel %vm291, %v227, 0
  %v908 = vsel %vm291, %v228, 0
  %v911 = vsel %vm291, %v229, 0
  %v914 = vsel %vm291, %v230, 0
  %v917 = vsel %vm291, %v231, 0
  %v920 = vsel %vm291, %v232, 0
  %v923 = vsel %vm291, %v233, 0
  %v926 = vsel %vm291, %v234, 0
  %v929 = vsel %vm291, %v235, 0
  %v932 = vsel %vm291, %v236, 0
  %v935 = vsel %vm291, %v237, 0
  %v938 = vsel %vm291, %v238, 0
  %v941 = vsel %vm291, %v239, 0
  %v944 = vsel %vm291, %v240, 0
  %v947 = vsel %vm291, %v241, 0
  %v950 = vsel %vm291, %v242, 0
  %v953 = vsel %vm291, %v243, 0
  %v956 = vsel %vm291, %v244, 0
  %v959 = vsel %vm291, %v245, 0
  %v962 = vsel %vm291, %v246, 0
  %v965 = vsel %vm291, %v247, 0
  %v968 = vsel %vm291, %v248, 0
  %v971 = vsel %vm291, %v249, 0
  %v974 = vsel %vm291, %v250, 0
  %v977 = vsel %vm291, %v251, 0
  %v980 = vsel %vm291, %v252, 0
  %v983 = vsel %vm291, %v253, 0
  %v986 = vsel %vm291, %v254, 0
  %v989 = vsel %vm291, %v255, 0
  %v992 = vsel %vm291, %v256, 0
  %v995 = vsel %vm291, %v257, 0
  %v998 = vsel %vm291, %v258, 0
  %v1001 = vsel %vm291, %v259, 0
  %v1004 = vsel %vm291, %v260, 0
  %v1007 = vsel %vm291, %v261, 0
  %v1010 = vsel %vm291, %v262, 0
  %v1013 = vsel %vm291, %v263, 0
  %v1016 = vsel %vm291, %v264, 0
  %v1019 = vsel %vm291, %v265, 0
  %v1022 = vsel %vm291, %v266, 0
  %v1025 = vsel %vm291, %v267, 0
  %v1028 = vsel %vm291, %v268, 0
  %v1031 = vsel %vm291, %v269, 0
  %v1034 = vsel %vm291, %v270, 0
  %v1037 = vsel %vm291, %v271, 0
  %v1040 = vsel %vm291, %v272, 0
  %v1043 = vsel %vm291, %v273, 0
  %v1046 = vsel %vm291, %v274, 0
  %v1049 = vsel %vm291, %v275, 0
  %v1052 = vsel %vm291, %v276, 0
  %v1055 = vsel %vm291, %v277, 0
  %v1058 = vsel %vm291, %v278, 0
  %vm1060 = vcmask 1043456
  %v1062 = vsel %vm1060, %v283, 0
  %1064 = vmatprep.subr.mxu0 0.0
  %1065 = vmatpush1.msra.mxu0 %v279
  %1066 = vmatprep.subr.mxu0 0.0
  %1067 = vmatpush1.msra.mxu0 %v280
  %1068 = vmatprep.subr.mxu0 0.0
  %1069 = vmatpush1.msra.mxu0 %v281
  %1070 = vmatprep.subr.mxu0 0.0
  %1071 = vmatpush1.msra.mxu0 %v282
  %1072 = vmatprep.subr.mxu0 0.0
  %1073 = vmatpush1.msra.mxu0 %v1062
  %1074 = vmatprep.subr.mxu0 0.0
  %1075 = vmatpush1.msra.mxu0 0.0
  %1076 = vmatprep.subr.mxu0 0.0
  %1077 = vmatpush1.msra.mxu0 0.0
  %1078 = vmatprep.subr.mxu0 0.0
  %1079 = vmatpush1.msra.mxu0 0.0
  %1080 = vmatprep.subr.mxu0 0.0
  %1081 = vmatpush1.msra.mxu0 0.0
  %1082 = vmatprep.subr.mxu0 0.0
  %1083 = vmatpush1.msra.mxu0 0.0
  %1084 = vmatprep.subr.mxu0 0.0
  %1085 = vmatpush1.msra.mxu0 0.0
  %1086 = vmatprep.subr.mxu0 0.0
  %1087 = vmatpush1.msra.mxu0 0.0
  %1088 = vmatprep.subr.mxu0 0.0
  %1089 = vmatpush1.msra.mxu0 0.0
  %1090 = vmatprep.subr.mxu0 0.0
  %1091 = vmatpush1.msra.mxu0 0.0
  %1092 = vmatprep.subr.mxu0 0.0
  %1093 = vmatpush1.msra.mxu0 0.0
  %1094 = vmatprep.subr.mxu0 0.0
  %1095 = vmatpush1.msra.mxu0 0.0
  %1096 = vmatprep.subr.mxu0 0.0
  %1097 = vmatpush1.msra.mxu0 0.0
  %1098 = vmatprep.subr.mxu0 0.0
  %1099 = vmatpush1.msra.mxu0 0.0
  %1100 = vmatprep.subr.mxu0 0.0
  %1101 = vmatpush1.msra.mxu0 0.0
  %1102 = vmatprep.subr.mxu0 0.0
  %1103 = vmatpush1.msra.mxu0 0.0
  %1104 = vmatprep.subr.mxu0 0.0
  %1105 = vmatpush1.msra.mxu0 0.0
  %1106 = vmatprep.subr.mxu0 0.0
  %1107 = vmatpush1.msra.mxu0 0.0
  %1108 = vmatprep.subr.mxu0 0.0
  %1109 = vmatpush1.msra.mxu0 0.0
  %1110 = vmatprep.subr.mxu0 0.0
  %1111 = vmatpush1.msra.mxu0 0.0
  %1112 = vmatprep.subr.mxu0 0.0
  %1113 = vmatpush1.msra.mxu0 0.0
  %1114 = vmatprep.subr.mxu0 0.0
  %1115 = vmatpush1.msra.mxu0 0.0
  %1116 = vmatprep.subr.mxu0 0.0
  %1117 = vmatpush1.msra.mxu0 0.0
  %1118 = vmatprep.subr.mxu0 0.0
  %1119 = vmatpush1.msra.mxu0 0.0
  %1120 = vmatprep.subr.mxu0 0.0
  %1121 = vmatpush1.msra.mxu0 0.0
  %1122 = vmatprep.subr.mxu0 0.0
  %1123 = vmatpush1.msra.mxu0 0.0
  %1124 = vmatprep.subr.mxu0 0.0
  %1125 = vmatpush1.msra.mxu0 0.0
  %1126 = vmatprep.subr.mxu0 0.0
  %1127 = vmatpush1.msra.mxu0 0.0
  %1128 = vmatprep.mubr.f32.mxu0 0.0
  %1129 = vmatmul.mubr.f32.gmra.mrb[0].mxu0 %v293
  %v1130 = vpop.f32.mrb[0].mxu0
  %v1131 = vadd.f32 %v289, %v1130
  %v1132 = vpop.f32.mrb[0].mxu0
  %1133 = vmatprep.mubr.f32.mxu0 0.0
  %1134 = vmatmul.mubr.f32.gmra.mrb[0].mxu0 %v296
  %v1135 = vpop.f32.mrb[0].mxu0
  %v1136 = vadd.f32 %v289, %v1135
  %v1137 = vpop.f32.mrb[0].mxu0
  %1138 = vmatprep.mubr.f32.mxu0 0.0
  %1139 = vmatmul.mubr.f32.gmra.mrb[0].mxu0 %v299
  %v1140 = vpop.f32.mrb[0].mxu0
  %v1141 = vadd.f32 %v289, %v1140
  %v1142 = vpop.f32.mrb[0].mxu0
  %1143 = vmatprep.mubr.f32.mxu0 0.0
  %1144 = vmatmul.mubr.f32.gmra.mrb[0].mxu0 %v302
  %v1145 = vpop.f32.mrb[0].mxu0
  %v1146 = vadd.f32 %v289, %v1145
  %v1147 = vpop.f32.mrb[0].mxu0
  %1148 = vmatprep.mubr.f32.mxu0 0.0
  %1149 = vmatmul.mubr.f32.gmra.mrb[0].mxu0 %v305
  %v1150 = vpop.f32.mrb[0].mxu0
  %v1151 = vadd.f32 %v289, %v1150
  %v1152 = vpop.f32.mrb[0].mxu0
  %1153 = vmatprep.mubr.f32.mxu0 0.0
  %1154 = vmatmul.mubr.f32.gmra.mrb[0].mxu0 %v308
  %v1155 = vpop.f32.mrb[0].mxu0
  %v1156 = vadd.f32 %v289, %v1155
  %v1157 = vpop.f32.mrb[0].mxu0
  %1158 = vmatprep.mubr.f32.mxu0 0.0
  %1159 = vmatmul.mubr.f32.gmra.mrb[0].mxu0 %v311
  %v1160 = vpop.f32.mrb[0].mxu0
  %v1161 = vadd.f32 %v289, %v1160
  %v1162 = vpop.f32.mrb[0].mxu0
  %1163 = vmatprep.mubr.f32.mxu0 0.0
  %1164 = vmatmul.mubr.f32.gmra.mrb[0].mxu0 %v314
  %v1165 = vpop.f32.mrb[0].mxu0
  %v1166 = vadd.f32 %v289, %v1165
  %v1167 = vpop.f32.mrb[0].mxu0
  %1168 = vmatprep.mubr.f32.mxu0 0.0
  %1169 = vmatmul.mubr.f32.gmra.mrb[0].mxu0 %v317
  %v1170 = vpop.f32.mrb[0].mxu0
  %v1171 = vadd.f32 %v289, %v1170
  %v1172 = vpop.f32.mrb[0].mxu0
  %1173 = vmatprep.mubr.f32.mxu0 0.0
  %1174 = vmatmul.mubr.f32.gmra.mrb[0].mxu0 %v320
  %v1175 = vpop.f32.mrb[0].mxu0
  %v1176 = vadd.f32 %v289, %v1175
  %v1177 = vpop.f32.mrb[0].mxu0
  %1178 = vmatprep.mubr.f32.mxu0 0.0
  %1179 = vmatmul.mubr.f32.gmra.mrb[0].mxu0 %v323
  %v1180 = vpop.f32.mrb[0].mxu0
  %v1181 = vadd.f32 %v289, %v1180
  %v1182 = vpop.f32.mrb[0].mxu0
  %1183 = vmatprep.mubr.f32.mxu0 0.0
  %1184 = vmatmul.mubr.f32.gmra.mrb[0].mxu0 %v326
  %v1185 = vpop.f32.mrb[0].mxu0
  %v1186 = vadd.f32 %v289, %v1185
  %v1187 = vpop.f32.mrb[0].mxu0
  %1188 = vmatprep.mubr.f32.mxu0 0.0
  %1189 = vmatmul.mubr.f32.gmra.mrb[0].mxu0 %v329
  %v1190 = vpop.f32.mrb[0].mxu0
  %v1191 = vadd.f32 %v289, %v1190
  %v1192 = vpop.f32.mrb[0].mxu0
  %1193 = vmatprep.mubr.f32.mxu0 0.0
  %1194 = vmatmul.mubr.f32.gmra.mrb[0].mxu0 %v332
  %v1195 = vpop.f32.mrb[0].mxu0
  %v1196 = vadd.f32 %v289, %v1195
  %v1197 = vpop.f32.mrb[0].mxu0
  %1198 = vmatprep.mubr.f32.mxu0 0.0
  %1199 = vmatmul.mubr.f32.gmra.mrb[0].mxu0 %v335
  %v1200 = vpop.f32.mrb[0].mxu0
  %v1201 = vadd.f32 %v289, %v1200
  %v1202 = vpop.f32.mrb[0].mxu0
  %1203 = vmatprep.mubr.f32.mxu0 0.0
  %1204 = vmatmul.mubr.f32.gmra.mrb[0].mxu0 %v338
  %v1205 = vpop.f32.mrb[0].mxu0
  %v1206 = vadd.f32 %v289, %v1205
  %v1207 = vpop.f32.mrb[0].mxu0
  %1208 = vmatprep.mubr.f32.mxu0 0.0
  %1209 = vmatmul.mubr.f32.gmra.mrb[0].mxu0 %v341
  %v1210 = vpop.f32.mrb[0].mxu0
  %v1211 = vadd.f32 %v289, %v1210
  %v1212 = vpop.f32.mrb[0].mxu0
  %1213 = vmatprep.mubr.f32.mxu0 0.0
  %1214 = vmatmul.mubr.f32.gmra.mrb[0].mxu0 %v344
  %v1215 = vpop.f32.mrb[0].mxu0
  %v1216 = vadd.f32 %v289, %v1215
  %v1217 = vpop.f32.mrb[0].mxu0
  %1218 = vmatprep.mubr.f32.mxu0 0.0
  %1219 = vmatmul.mubr.f32.gmra.mrb[0].mxu0 %v347
  %v1220 = vpop.f32.mrb[0].mxu0
  %v1221 = vadd.f32 %v289, %v1220
  %v1222 = vpop.f32.mrb[0].mxu0
  %1223 = vmatprep.mubr.f32.mxu0 0.0
  %1224 = vmatmul.mubr.f32.gmra.mrb[0].mxu0 %v350
  %v1225 = vpop.f32.mrb[0].mxu0
  %v1226 = vadd.f32 %v289, %v1225
  %v1227 = vpop.f32.mrb[0].mxu0
  %1228 = vmatprep.mubr.f32.mxu0 0.0
  %1229 = vmatmul.mubr.f32.gmra.mrb[0].mxu0 %v353
  %v1230 = vpop.f32.mrb[0].mxu0
  %v1231 = vadd.f32 %v289, %v1230
  %v1232 = vpop.f32.mrb[0].mxu0
  %1233 = vmatprep.mubr.f32.mxu0 0.0
  %1234 = vmatmul.mubr.f32.gmra.mrb[0].mxu0 %v356
  %v1235 = vpop.f32.mrb[0].mxu0
  %v1236 = vadd.f32 %v289, %v1235
  %v1237 = vpop.f32.mrb[0].mxu0
  %1238 = vmatprep.mubr.f32.mxu0 0.0
  %1239 = vmatmul.mubr.f32.gmra.mrb[0].mxu0 %v359
  %v1240 = vpop.f32.mrb[0].mxu0
  %v1241 = vadd.f32 %v289, %v1240
  %v1242 = vpop.f32.mrb[0].mxu0
  %1243 = vmatprep.mubr.f32.mxu0 0.0
  %1244 = vmatmul.mubr.f32.gmra.mrb[0].mxu0 %v362
  %v1245 = vpop.f32.mrb[0].mxu0
  %v1246 = vadd.f32 %v289, %v1245
  %v1247 = vpop.f32.mrb[0].mxu0
  %1248 = vmatprep.mubr.f32.mxu0 0.0
  %1249 = vmatmul.mubr.f32.gmra.mrb[0].mxu0 %v365
  %v1250 = vpop.f32.mrb[0].mxu0
  %v1251 = vadd.f32 %v289, %v1250
  %v1252 = vpop.f32.mrb[0].mxu0
  %1253 = vmatprep.mubr.f32.mxu0 0.0
  %1254 = vmatmul.mubr.f32.gmra.mrb[0].mxu0 %v368
  %v1255 = vpop.f32.mrb[0].mxu0
  %v1256 = vadd.f32 %v289, %v1255
  %v1257 = vpop.f32.mrb[0].mxu0
  %1258 = vmatprep.mubr.f32.mxu0 0.0
  %1259 = vmatmul.mubr.f32.gmra.mrb[0].mxu0 %v371
  %v1260 = vpop.f32.mrb[0].mxu0
  %v1261 = vadd.f32 %v289, %v1260
  %v1262 = vpop.f32.mrb[0].mxu0
  %1263 = vmatprep.mubr.f32.mxu0 0.0
  %1264 = vmatmul.mubr.f32.gmra.mrb[0].mxu0 %v374
  %v1265 = vpop.f32.mrb[0].mxu0
  %v1266 = vadd.f32 %v289, %v1265
  %v1267 = vpop.f32.mrb[0].mxu0
  %1268 = vmatprep.mubr.f32.mxu0 0.0
  %1269 = vmatmul.mubr.f32.gmra.mrb[0].mxu0 %v377
  %v1270 = vpop.f32.mrb[0].mxu0
  %v1271 = vadd.f32 %v289, %v1270
  %v1272 = vpop.f32.mrb[0].mxu0
  %1273 = vmatprep.mubr.f32.mxu0 0.0
  %1274 = vmatmul.mubr.f32.gmra.mrb[0].mxu0 %v380
  %v1275 = vpop.f32.mrb[0].mxu0
  %v1276 = vadd.f32 %v289, %v1275
  %v1277 = vpop.f32.mrb[0].mxu0
  %1278 = vmatprep.mubr.f32.mxu0 0.0
  %1279 = vmatmul.mubr.f32.gmra.mrb[0].mxu0 %v383
  %v1280 = vpop.f32.mrb[0].mxu0
  %v1281 = vadd.f32 %v289, %v1280
  %v1282 = vpop.f32.mrb[0].mxu0
  %1283 = vmatprep.mubr.f32.mxu0 0.0
  %1284 = vmatmul.mubr.f32.gmra.mrb[0].mxu0 %v386
  %v1285 = vpop.f32.mrb[0].mxu0
  %v1286 = vadd.f32 %v289, %v1285
  %v1287 = vpop.f32.mrb[0].mxu0
  %1288 = vmatprep.mubr.f32.mxu0 0.0
  %1289 = vmatmul.mubr.f32.gmra.mrb[0].mxu0 %v389
  %v1290 = vpop.f32.mrb[0].mxu0
  %v1291 = vadd.f32 %v289, %v1290
  %v1292 = vpop.f32.mrb[0].mxu0
  %1293 = vmatprep.mubr.f32.mxu0 0.0
  %1294 = vmatmul.mubr.f32.gmra.mrb[0].mxu0 %v392
  %v1295 = vpop.f32.mrb[0].mxu0
  %v1296 = vadd.f32 %v289, %v1295
  %v1297 = vpop.f32.mrb[0].mxu0
  %1298 = vmatprep.mubr.f32.mxu0 0.0
  %1299 = vmatmul.mubr.f32.gmra.mrb[0].mxu0 %v395
  %v1300 = vpop.f32.mrb[0].mxu0
  %v1301 = vadd.f32 %v289, %v1300
  %v1302 = vpop.f32.mrb[0].mxu0
  %1303 = vmatprep.mubr.f32.mxu0 0.0
  %1304 = vmatmul.mubr.f32.gmra.mrb[0].mxu0 %v398
  %v1305 = vpop.f32.mrb[0].mxu0
  %v1306 = vadd.f32 %v289, %v1305
  %v1307 = vpop.f32.mrb[0].mxu0
  %1308 = vmatprep.mubr.f32.mxu0 0.0
  %1309 = vmatmul.mubr.f32.gmra.mrb[0].mxu0 %v401
  %v1310 = vpop.f32.mrb[0].mxu0
  %v1311 = vadd.f32 %v289, %v1310
  %v1312 = vpop.f32.mrb[0].mxu0
  %1313 = vmatprep.mubr.f32.mxu0 0.0
  %1314 = vmatmul.mubr.f32.gmra.mrb[0].mxu0 %v404
  %v1315 = vpop.f32.mrb[0].mxu0
  %v1316 = vadd.f32 %v289, %v1315
  %v1317 = vpop.f32.mrb[0].mxu0
  %1318 = vmatprep.mubr.f32.mxu0 0.0
  %1319 = vmatmul.mubr.f32.gmra.mrb[0].mxu0 %v407
  %v1320 = vpop.f32.mrb[0].mxu0
  %v1321 = vadd.f32 %v289, %v1320
  %v1322 = vpop.f32.mrb[0].mxu0
  %1323 = vmatprep.mubr.f32.mxu0 0.0
  %1324 = vmatmul.mubr.f32.gmra.mrb[0].mxu0 %v410
  %v1325 = vpop.f32.mrb[0].mxu0
  %v1326 = vadd.f32 %v289, %v1325
  %v1327 = vpop.f32.mrb[0].mxu0
  %1328 = vmatprep.mubr.f32.mxu0 0.0
  %1329 = vmatmul.mubr.f32.gmra.mrb[0].mxu0 %v413
  %v1330 = vpop.f32.mrb[0].mxu0
  %v1331 = vadd.f32 %v289, %v1330
  %v1332 = vpop.f32.mrb[0].mxu0
  %1333 = vmatprep.mubr.f32.mxu0 0.0
  %1334 = vmatmul.mubr.f32.gmra.mrb[0].mxu0 %v416
  %v1335 = vpop.f32.mrb[0].mxu0
  %v1336 = vadd.f32 %v289, %v1335
  %v1337 = vpop.f32.mrb[0].mxu0
  %1338 = vmatprep.mubr.f32.mxu0 0.0
  %1339 = vmatmul.mubr.f32.gmra.mrb[0].mxu0 %v419
  %v1340 = vpop.f32.mrb[0].mxu0
  %v1341 = vadd.f32 %v289, %v1340
  %v1342 = vpop.f32.mrb[0].mxu0
  %1343 = vmatprep.mubr.f32.mxu0 0.0
  %1344 = vmatmul.mubr.f32.gmra.mrb[0].mxu0 %v422
  %v1345 = vpop.f32.mrb[0].mxu0
  %v1346 = vadd.f32 %v289, %v1345
  %v1347 = vpop.f32.mrb[0].mxu0
  %1348 = vmatprep.mubr.f32.mxu0 0.0
  %1349 = vmatmul.mubr.f32.gmra.mrb[0].mxu0 %v425
  %v1350 = vpop.f32.mrb[0].mxu0
  %v1351 = vadd.f32 %v289, %v1350
  %v1352 = vpop.f32.mrb[0].mxu0
  %1353 = vmatprep.mubr.f32.mxu0 0.0
  %1354 = vmatmul.mubr.f32.gmra.mrb[0].mxu0 %v428
  %v1355 = vpop.f32.mrb[0].mxu0
  %v1356 = vadd.f32 %v289, %v1355
  %v1357 = vpop.f32.mrb[0].mxu0
  %1358 = vmatprep.mubr.f32.mxu0 0.0
  %1359 = vmatmul.mubr.f32.gmra.mrb[0].mxu0 %v431
  %v1360 = vpop.f32.mrb[0].mxu0
  %v1361 = vadd.f32 %v289, %v1360
  %v1362 = vpop.f32.mrb[0].mxu0
  %1363 = vmatprep.mubr.f32.mxu0 0.0
  %1364 = vmatmul.mubr.f32.gmra.mrb[0].mxu0 %v434
  %v1365 = vpop.f32.mrb[0].mxu0
  %v1366 = vadd.f32 %v289, %v1365
  %v1367 = vpop.f32.mrb[0].mxu0
  %1368 = vmatprep.mubr.f32.mxu0 0.0
  %1369 = vmatmul.mubr.f32.gmra.mrb[0].mxu0 %v437
  %v1370 = vpop.f32.mrb[0].mxu0
  %v1371 = vadd.f32 %v289, %v1370
  %v1372 = vpop.f32.mrb[0].mxu0
  %1373 = vmatprep.mubr.f32.mxu0 0.0
  %1374 = vmatmul.mubr.f32.gmra.mrb[0].mxu0 %v440
  %v1375 = vpop.f32.mrb[0].mxu0
  %v1376 = vadd.f32 %v289, %v1375
  %v1377 = vpop.f32.mrb[0].mxu0
  %1378 = vmatprep.mubr.f32.mxu0 0.0
  %1379 = vmatmul.mubr.f32.gmra.mrb[0].mxu0 %v443
  %v1380 = vpop.f32.mrb[0].mxu0
  %v1381 = vadd.f32 %v289, %v1380
  %v1382 = vpop.f32.mrb[0].mxu0
  %1383 = vmatprep.mubr.f32.mxu0 0.0
  %1384 = vmatmul.mubr.f32.gmra.mrb[0].mxu0 %v446
  %v1385 = vpop.f32.mrb[0].mxu0
  %v1386 = vadd.f32 %v289, %v1385
  %v1387 = vpop.f32.mrb[0].mxu0
  %1388 = vmatprep.mubr.f32.mxu0 0.0
  %1389 = vmatmul.mubr.f32.gmra.mrb[0].mxu0 %v449
  %v1390 = vpop.f32.mrb[0].mxu0
  %v1391 = vadd.f32 %v289, %v1390
  %v1392 = vpop.f32.mrb[0].mxu0
  %1393 = vmatprep.mubr.f32.mxu0 0.0
  %1394 = vmatmul.mubr.f32.gmra.mrb[0].mxu0 %v452
  %v1395 = vpop.f32.mrb[0].mxu0
  %v1396 = vadd.f32 %v289, %v1395
  %v1397 = vpop.f32.mrb[0].mxu0
  %1398 = vmatprep.mubr.f32.mxu0 0.0
  %1399 = vmatmul.mubr.f32.gmra.mrb[0].mxu0 %v455
  %v1400 = vpop.f32.mrb[0].mxu0
  %v1401 = vadd.f32 %v289, %v1400
  %v1402 = vpop.f32.mrb[0].mxu0
  %1403 = vmatprep.mubr.f32.mxu0 0.0
  %1404 = vmatmul.mubr.f32.gmra.mrb[0].mxu0 %v458
  %v1405 = vpop.f32.mrb[0].mxu0
  %v1406 = vadd.f32 %v289, %v1405
  %v1407 = vpop.f32.mrb[0].mxu0
  %1408 = vmatprep.mubr.f32.mxu0 0.0
  %1409 = vmatmul.mubr.f32.gmra.mrb[0].mxu0 %v461
  %v1410 = vpop.f32.mrb[0].mxu0
  %v1411 = vadd.f32 %v289, %v1410
  %v1412 = vpop.f32.mrb[0].mxu0
  %1413 = vmatprep.mubr.f32.mxu0 0.0
  %1414 = vmatmul.mubr.f32.gmra.mrb[0].mxu0 %v464
  %v1415 = vpop.f32.mrb[0].mxu0
  %v1416 = vadd.f32 %v289, %v1415
  %v1417 = vpop.f32.mrb[0].mxu0
  %1418 = vmatprep.mubr.f32.mxu0 0.0
  %1419 = vmatmul.mubr.f32.gmra.mrb[0].mxu0 %v467
  %v1420 = vpop.f32.mrb[0].mxu0
  %v1421 = vadd.f32 %v289, %v1420
  %v1422 = vpop.f32.mrb[0].mxu0
  %1423 = vmatprep.mubr.f32.mxu0 0.0
  %1424 = vmatmul.mubr.f32.gmra.mrb[0].mxu0 %v470
  %v1425 = vpop.f32.mrb[0].mxu0
  %v1426 = vadd.f32 %v289, %v1425
  %v1427 = vpop.f32.mrb[0].mxu0
  %1428 = vmatprep.mubr.f32.mxu0 0.0
  %1429 = vmatmul.mubr.f32.gmra.mrb[0].mxu0 %v473
  %v1430 = vpop.f32.mrb[0].mxu0
  %v1431 = vadd.f32 %v289, %v1430
  %v1432 = vpop.f32.mrb[0].mxu0
  %1433 = vmatprep.mubr.f32.mxu0 0.0
  %1434 = vmatmul.mubr.f32.gmra.mrb[0].mxu0 %v476
  %v1435 = vpop.f32.mrb[0].mxu0
  %v1436 = vadd.f32 %v289, %v1435
  %v1437 = vpop.f32.mrb[0].mxu0
  %1438 = vmatprep.mubr.f32.mxu0 0.0
  %1439 = vmatmul.mubr.f32.gmra.mrb[0].mxu0 %v479
  %v1440 = vpop.f32.mrb[0].mxu0
  %v1441 = vadd.f32 %v289, %v1440
  %v1442 = vpop.f32.mrb[0].mxu0
  %1443 = vmatprep.mubr.f32.mxu0 0.0
  %1444 = vmatmul.mubr.f32.gmra.mrb[0].mxu0 %v482
  %v1445 = vpop.f32.mrb[0].mxu0
  %v1446 = vadd.f32 %v289, %v1445
  %v1447 = vpop.f32.mrb[0].mxu0
  %1448 = vmatprep.mubr.f32.mxu0 0.0
  %1449 = vmatmul.mubr.f32.gmra.mrb[0].mxu0 %v485
  %v1450 = vpop.f32.mrb[0].mxu0
  %v1451 = vadd.f32 %v289, %v1450
  %v1452 = vpop.f32.mrb[0].mxu0
  %1453 = vmatprep.mubr.f32.mxu0 0.0
  %1454 = vmatmul.mubr.f32.gmra.mrb[0].mxu0 %v488
  %v1455 = vpop.f32.mrb[0].mxu0
  %v1456 = vadd.f32 %v289, %v1455
  %v1457 = vpop.f32.mrb[0].mxu0
  %1458 = vmatprep.mubr.f32.mxu0 0.0
  %1459 = vmatmul.mubr.f32.gmra.mrb[0].mxu0 %v491
  %v1460 = vpop.f32.mrb[0].mxu0
  %v1461 = vadd.f32 %v289, %v1460
  %v1462 = vpop.f32.mrb[0].mxu0
  %1463 = vmatprep.mubr.f32.mxu0 0.0
  %1464 = vmatmul.mubr.f32.gmra.mrb[0].mxu0 %v494
  %v1465 = vpop.f32.mrb[0].mxu0
  %v1466 = vadd.f32 %v289, %v1465
  %v1467 = vpop.f32.mrb[0].mxu0
  %1468 = vmatprep.mubr.f32.mxu0 0.0
  %1469 = vmatmul.mubr.f32.gmra.mrb[0].mxu0 %v497
  %v1470 = vpop.f32.mrb[0].mxu0
  %v1471 = vadd.f32 %v289, %v1470
  %v1472 = vpop.f32.mrb[0].mxu0
  %1473 = vmatprep.mubr.f32.mxu0 0.0
  %1474 = vmatmul.mubr.f32.gmra.mrb[0].mxu0 %v500
  %v1475 = vpop.f32.mrb[0].mxu0
  %v1476 = vadd.f32 %v289, %v1475
  %v1477 = vpop.f32.mrb[0].mxu0
  %1478 = vmatprep.mubr.f32.mxu0 0.0
  %1479 = vmatmul.mubr.f32.gmra.mrb[0].mxu0 %v503
  %v1480 = vpop.f32.mrb[0].mxu0
  %v1481 = vadd.f32 %v289, %v1480
  %v1482 = vpop.f32.mrb[0].mxu0
  %1483 = vmatprep.mubr.f32.mxu0 0.0
  %1484 = vmatmul.mubr.f32.gmra.mrb[0].mxu0 %v506
  %v1485 = vpop.f32.mrb[0].mxu0
  %v1486 = vadd.f32 %v289, %v1485
  %v1487 = vpop.f32.mrb[0].mxu0
  %1488 = vmatprep.mubr.f32.mxu0 0.0
  %1489 = vmatmul.mubr.f32.gmra.mrb[0].mxu0 %v509
  %v1490 = vpop.f32.mrb[0].mxu0
  %v1491 = vadd.f32 %v289, %v1490
  %v1492 = vpop.f32.mrb[0].mxu0
  %1493 = vmatprep.mubr.f32.mxu0 0.0
  %1494 = vmatmul.mubr.f32.gmra.mrb[0].mxu0 %v512
  %v1495 = vpop.f32.mrb[0].mxu0
  %v1496 = vadd.f32 %v289, %v1495
  %v1497 = vpop.f32.mrb[0].mxu0
  %1498 = vmatprep.mubr.f32.mxu0 0.0
  %1499 = vmatmul.mubr.f32.gmra.mrb[0].mxu0 %v515
  %v1500 = vpop.f32.mrb[0].mxu0
  %v1501 = vadd.f32 %v289, %v1500
  %v1502 = vpop.f32.mrb[0].mxu0
  %1503 = vmatprep.mubr.f32.mxu0 0.0
  %1504 = vmatmul.mubr.f32.gmra.mrb[0].mxu0 %v518
  %v1505 = vpop.f32.mrb[0].mxu0
  %v1506 = vadd.f32 %v289, %v1505
  %v1507 = vpop.f32.mrb[0].mxu0
  %1508 = vmatprep.mubr.f32.mxu0 0.0
  %1509 = vmatmul.mubr.f32.gmra.mrb[0].mxu0 %v521
  %v1510 = vpop.f32.mrb[0].mxu0
  %v1511 = vadd.f32 %v289, %v1510
  %v1512 = vpop.f32.mrb[0].mxu0
  %1513 = vmatprep.mubr.f32.mxu0 0.0
  %1514 = vmatmul.mubr.f32.gmra.mrb[0].mxu0 %v524
  %v1515 = vpop.f32.mrb[0].mxu0
  %v1516 = vadd.f32 %v289, %v1515
  %v1517 = vpop.f32.mrb[0].mxu0
  %1518 = vmatprep.mubr.f32.mxu0 0.0
  %1519 = vmatmul.mubr.f32.gmra.mrb[0].mxu0 %v527
  %v1520 = vpop.f32.mrb[0].mxu0
  %v1521 = vadd.f32 %v289, %v1520
  %v1522 = vpop.f32.mrb[0].mxu0
  %1523 = vmatprep.mubr.f32.mxu0 0.0
  %1524 = vmatmul.mubr.f32.gmra.mrb[0].mxu0 %v530
  %v1525 = vpop.f32.mrb[0].mxu0
  %v1526 = vadd.f32 %v289, %v1525
  %v1527 = vpop.f32.mrb[0].mxu0
  %1528 = vmatprep.mubr.f32.mxu0 0.0
  %1529 = vmatmul.mubr.f32.gmra.mrb[0].mxu0 %v533
  %v1530 = vpop.f32.mrb[0].mxu0
  %v1531 = vadd.f32 %v289, %v1530
  %v1532 = vpop.f32.mrb[0].mxu0
  %1533 = vmatprep.mubr.f32.mxu0 0.0
  %1534 = vmatmul.mubr.f32.gmra.mrb[0].mxu0 %v536
  %v1535 = vpop.f32.mrb[0].mxu0
  %v1536 = vadd.f32 %v289, %v1535
  %v1537 = vpop.f32.mrb[0].mxu0
  %1538 = vmatprep.mubr.f32.mxu0 0.0
  %1539 = vmatmul.mubr.f32.gmra.mrb[0].mxu0 %v539
  %v1540 = vpop.f32.mrb[0].mxu0
  %v1541 = vadd.f32 %v289, %v1540
  %v1542 = vpop.f32.mrb[0].mxu0
  %1543 = vmatprep.mubr.f32.mxu0 0.0
  %1544 = vmatmul.mubr.f32.gmra.mrb[0].mxu0 %v542
  %v1545 = vpop.f32.mrb[0].mxu0
  %v1546 = vadd.f32 %v289, %v1545
  %v1547 = vpop.f32.mrb[0].mxu0
  %1548 = vmatprep.mubr.f32.mxu0 0.0
  %1549 = vmatmul.mubr.f32.gmra.mrb[0].mxu0 %v545
  %v1550 = vpop.f32.mrb[0].mxu0
  %v1551 = vadd.f32 %v289, %v1550
  %v1552 = vpop.f32.mrb[0].mxu0
  %1553 = vmatprep.mubr.f32.mxu0 0.0
  %1554 = vmatmul.mubr.f32.gmra.mrb[0].mxu0 %v548
  %v1555 = vpop.f32.mrb[0].mxu0
  %v1556 = vadd.f32 %v289, %v1555
  %v1557 = vpop.f32.mrb[0].mxu0
  %1558 = vmatprep.mubr.f32.mxu0 0.0
  %1559 = vmatmul.mubr.f32.gmra.mrb[0].mxu0 %v551
  %v1560 = vpop.f32.mrb[0].mxu0
  %v1561 = vadd.f32 %v289, %v1560
  %v1562 = vpop.f32.mrb[0].mxu0
  %1563 = vmatprep.mubr.f32.mxu0 0.0
  %1564 = vmatmul.mubr.f32.gmra.mrb[0].mxu0 %v554
  %v1565 = vpop.f32.mrb[0].mxu0
  %v1566 = vadd.f32 %v289, %v1565
  %v1567 = vpop.f32.mrb[0].mxu0
  %1568 = vmatprep.mubr.f32.mxu0 0.0
  %1569 = vmatmul.mubr.f32.gmra.mrb[0].mxu0 %v557
  %v1570 = vpop.f32.mrb[0].mxu0
  %v1571 = vadd.f32 %v289, %v1570
  %v1572 = vpop.f32.mrb[0].mxu0
  %1573 = vmatprep.mubr.f32.mxu0 0.0
  %1574 = vmatmul.mubr.f32.gmra.mrb[0].mxu0 %v560
  %v1575 = vpop.f32.mrb[0].mxu0
  %v1576 = vadd.f32 %v289, %v1575
  %v1577 = vpop.f32.mrb[0].mxu0
  %1578 = vmatprep.mubr.f32.mxu0 0.0
  %1579 = vmatmul.mubr.f32.gmra.mrb[0].mxu0 %v563
  %v1580 = vpop.f32.mrb[0].mxu0
  %v1581 = vadd.f32 %v289, %v1580
  %v1582 = vpop.f32.mrb[0].mxu0
  %1583 = vmatprep.mubr.f32.mxu0 0.0
  %1584 = vmatmul.mubr.f32.gmra.mrb[0].mxu0 %v566
  %v1585 = vpop.f32.mrb[0].mxu0
  %v1586 = vadd.f32 %v289, %v1585
  %v1587 = vpop.f32.mrb[0].mxu0
  %1588 = vmatprep.mubr.f32.mxu0 0.0
  %1589 = vmatmul.mubr.f32.gmra.mrb[0].mxu0 %v569
  %v1590 = vpop.f32.mrb[0].mxu0
  %v1591 = vadd.f32 %v289, %v1590
  %v1592 = vpop.f32.mrb[0].mxu0
  %1593 = vmatprep.mubr.f32.mxu0 0.0
  %1594 = vmatmul.mubr.f32.gmra.mrb[0].mxu0 %v572
  %v1595 = vpop.f32.mrb[0].mxu0
  %v1596 = vadd.f32 %v289, %v1595
  %v1597 = vpop.f32.mrb[0].mxu0
  %1598 = vmatprep.mubr.f32.mxu0 0.0
  %1599 = vmatmul.mubr.f32.gmra.mrb[0].mxu0 %v575
  %v1600 = vpop.f32.mrb[0].mxu0
  %v1601 = vadd.f32 %v289, %v1600
  %v1602 = vpop.f32.mrb[0].mxu0
  %1603 = vmatprep.mubr.f32.mxu0 0.0
  %1604 = vmatmul.mubr.f32.gmra.mrb[0].mxu0 %v578
  %v1605 = vpop.f32.mrb[0].mxu0
  %v1606 = vadd.f32 %v289, %v1605
  %v1607 = vpop.f32.mrb[0].mxu0
  %1608 = vmatprep.mubr.f32.mxu0 0.0
  %1609 = vmatmul.mubr.f32.gmra.mrb[0].mxu0 %v581
  %v1610 = vpop.f32.mrb[0].mxu0
  %v1611 = vadd.f32 %v289, %v1610
  %v1612 = vpop.f32.mrb[0].mxu0
  %1613 = vmatprep.mubr.f32.mxu0 0.0
  %1614 = vmatmul.mubr.f32.gmra.mrb[0].mxu0 %v584
  %v1615 = vpop.f32.mrb[0].mxu0
  %v1616 = vadd.f32 %v289, %v1615
  %v1617 = vpop.f32.mrb[0].mxu0
  %1618 = vmatprep.mubr.f32.mxu0 0.0
  %1619 = vmatmul.mubr.f32.gmra.mrb[0].mxu0 %v587
  %v1620 = vpop.f32.mrb[0].mxu0
  %v1621 = vadd.f32 %v289, %v1620
  %v1622 = vpop.f32.mrb[0].mxu0
  %1623 = vmatprep.mubr.f32.mxu0 0.0
  %1624 = vmatmul.mubr.f32.gmra.mrb[0].mxu0 %v590
  %v1625 = vpop.f32.mrb[0].mxu0
  %v1626 = vadd.f32 %v289, %v1625
  %v1627 = vpop.f32.mrb[0].mxu0
  %1628 = vmatprep.mubr.f32.mxu0 0.0
  %1629 = vmatmul.mubr.f32.gmra.mrb[0].mxu0 %v593
  %v1630 = vpop.f32.mrb[0].mxu0
  %v1631 = vadd.f32 %v289, %v1630
  %v1632 = vpop.f32.mrb[0].mxu0
  %1633 = vmatprep.mubr.f32.mxu0 0.0
  %1634 = vmatmul.mubr.f32.gmra.mrb[0].mxu0 %v596
  %v1635 = vpop.f32.mrb[0].mxu0
  %v1636 = vadd.f32 %v289, %v1635
  %v1637 = vpop.f32.mrb[0].mxu0
  %1638 = vmatprep.mubr.f32.mxu0 0.0
  %1639 = vmatmul.mubr.f32.gmra.mrb[0].mxu0 %v599
  %v1640 = vpop.f32.mrb[0].mxu0
  %v1641 = vadd.f32 %v289, %v1640
  %v1642 = vpop.f32.mrb[0].mxu0
  %1643 = vmatprep.mubr.f32.mxu0 0.0
  %1644 = vmatmul.mubr.f32.gmra.mrb[0].mxu0 %v602
  %v1645 = vpop.f32.mrb[0].mxu0
  %v1646 = vadd.f32 %v289, %v1645
  %v1647 = vpop.f32.mrb[0].mxu0
  %1648 = vmatprep.mubr.f32.mxu0 0.0
  %1649 = vmatmul.mubr.f32.gmra.mrb[0].mxu0 %v605
  %v1650 = vpop.f32.mrb[0].mxu0
  %v1651 = vadd.f32 %v289, %v1650
  %v1652 = vpop.f32.mrb[0].mxu0
  %1653 = vmatprep.mubr.f32.mxu0 0.0
  %1654 = vmatmul.mubr.f32.gmra.mrb[0].mxu0 %v608
  %v1655 = vpop.f32.mrb[0].mxu0
  %v1656 = vadd.f32 %v289, %v1655
  %v1657 = vpop.f32.mrb[0].mxu0
  %1658 = vmatprep.mubr.f32.mxu0 0.0
  %1659 = vmatmul.mubr.f32.gmra.mrb[0].mxu0 %v611
  %v1660 = vpop.f32.mrb[0].mxu0
  %v1661 = vadd.f32 %v289, %v1660
  %v1662 = vpop.f32.mrb[0].mxu0
  %1663 = vmatprep.mubr.f32.mxu0 0.0
  %1664 = vmatmul.mubr.f32.gmra.mrb[0].mxu0 %v614
  %v1665 = vpop.f32.mrb[0].mxu0
  %v1666 = vadd.f32 %v289, %v1665
  %v1667 = vpop.f32.mrb[0].mxu0
  %1668 = vmatprep.mubr.f32.mxu0 0.0
  %1669 = vmatmul.mubr.f32.gmra.mrb[0].mxu0 %v617
  %v1670 = vpop.f32.mrb[0].mxu0
  %v1671 = vadd.f32 %v289, %v1670
  %v1672 = vpop.f32.mrb[0].mxu0
  %1673 = vmatprep.mubr.f32.mxu0 0.0
  %1674 = vmatmul.mubr.f32.gmra.mrb[0].mxu0 %v620
  %v1675 = vpop.f32.mrb[0].mxu0
  %v1676 = vadd.f32 %v289, %v1675
  %v1677 = vpop.f32.mrb[0].mxu0
  %1678 = vmatprep.mubr.f32.mxu0 0.0
  %1679 = vmatmul.mubr.f32.gmra.mrb[0].mxu0 %v623
  %v1680 = vpop.f32.mrb[0].mxu0
  %v1681 = vadd.f32 %v289, %v1680
  %v1682 = vpop.f32.mrb[0].mxu0
  %1683 = vmatprep.mubr.f32.mxu0 0.0
  %1684 = vmatmul.mubr.f32.gmra.mrb[0].mxu0 %v626
  %v1685 = vpop.f32.mrb[0].mxu0
  %v1686 = vadd.f32 %v289, %v1685
  %v1687 = vpop.f32.mrb[0].mxu0
  %1688 = vmatprep.mubr.f32.mxu0 0.0
  %1689 = vmatmul.mubr.f32.gmra.mrb[0].mxu0 %v629
  %v1690 = vpop.f32.mrb[0].mxu0
  %v1691 = vadd.f32 %v289, %v1690
  %v1692 = vpop.f32.mrb[0].mxu0
  %1693 = vmatprep.mubr.f32.mxu0 0.0
  %1694 = vmatmul.mubr.f32.gmra.mrb[0].mxu0 %v632
  %v1695 = vpop.f32.mrb[0].mxu0
  %v1696 = vadd.f32 %v289, %v1695
  %v1697 = vpop.f32.mrb[0].mxu0
  %1698 = vmatprep.mubr.f32.mxu0 0.0
  %1699 = vmatmul.mubr.f32.gmra.mrb[0].mxu0 %v635
  %v1700 = vpop.f32.mrb[0].mxu0
  %v1701 = vadd.f32 %v289, %v1700
  %v1702 = vpop.f32.mrb[0].mxu0
  %1703 = vmatprep.mubr.f32.mxu0 0.0
  %1704 = vmatmul.mubr.f32.gmra.mrb[0].mxu0 %v638
  %v1705 = vpop.f32.mrb[0].mxu0
  %v1706 = vadd.f32 %v289, %v1705
  %v1707 = vpop.f32.mrb[0].mxu0
  %1708 = vmatprep.mubr.f32.mxu0 0.0
  %1709 = vmatmul.mubr.f32.gmra.mrb[0].mxu0 %v641
  %v1710 = vpop.f32.mrb[0].mxu0
  %v1711 = vadd.f32 %v289, %v1710
  %v1712 = vpop.f32.mrb[0].mxu0
  %1713 = vmatprep.mubr.f32.mxu0 0.0
  %1714 = vmatmul.mubr.f32.gmra.mrb[0].mxu0 %v644
  %v1715 = vpop.f32.mrb[0].mxu0
  %v1716 = vadd.f32 %v289, %v1715
  %v1717 = vpop.f32.mrb[0].mxu0
  %1718 = vmatprep.mubr.f32.mxu0 0.0
  %1719 = vmatmul.mubr.f32.gmra.mrb[0].mxu0 %v647
  %v1720 = vpop.f32.mrb[0].mxu0
  %v1721 = vadd.f32 %v289, %v1720
  %v1722 = vpop.f32.mrb[0].mxu0
  %1723 = vmatprep.mubr.f32.mxu0 0.0
  %1724 = vmatmul.mubr.f32.gmra.mrb[0].mxu0 %v650
  %v1725 = vpop.f32.mrb[0].mxu0
  %v1726 = vadd.f32 %v289, %v1725
  %v1727 = vpop.f32.mrb[0].mxu0
  %1728 = vmatprep.mubr.f32.mxu0 0.0
  %1729 = vmatmul.mubr.f32.gmra.mrb[0].mxu0 %v653
  %v1730 = vpop.f32.mrb[0].mxu0
  %v1731 = vadd.f32 %v289, %v1730
  %v1732 = vpop.f32.mrb[0].mxu0
  %1733 = vmatprep.mubr.f32.mxu0 0.0
  %1734 = vmatmul.mubr.f32.gmra.mrb[0].mxu0 %v656
  %v1735 = vpop.f32.mrb[0].mxu0
  %v1736 = vadd.f32 %v289, %v1735
  %v1737 = vpop.f32.mrb[0].mxu0
  %1738 = vmatprep.mubr.f32.mxu0 0.0
  %1739 = vmatmul.mubr.f32.gmra.mrb[0].mxu0 %v659
  %v1740 = vpop.f32.mrb[0].mxu0
  %v1741 = vadd.f32 %v289, %v1740
  %v1742 = vpop.f32.mrb[0].mxu0
  %1743 = vmatprep.mubr.f32.mxu0 0.0
  %1744 = vmatmul.mubr.f32.gmra.mrb[0].mxu0 %v662
  %v1745 = vpop.f32.mrb[0].mxu0
  %v1746 = vadd.f32 %v289, %v1745
  %v1747 = vpop.f32.mrb[0].mxu0
  %1748 = vmatprep.mubr.f32.mxu0 0.0
  %1749 = vmatmul.mubr.f32.gmra.mrb[0].mxu0 %v665
  %v1750 = vpop.f32.mrb[0].mxu0
  %v1751 = vadd.f32 %v289, %v1750
  %v1752 = vpop.f32.mrb[0].mxu0
  %1753 = vmatprep.mubr.f32.mxu0 0.0
  %1754 = vmatmul.mubr.f32.gmra.mrb[0].mxu0 %v668
  %v1755 = vpop.f32.mrb[0].mxu0
  %v1756 = vadd.f32 %v289, %v1755
  %v1757 = vpop.f32.mrb[0].mxu0
  %1758 = vmatprep.mubr.f32.mxu0 0.0
  %1759 = vmatmul.mubr.f32.gmra.mrb[0].mxu0 %v671
  %v1760 = vpop.f32.mrb[0].mxu0
  %v1761 = vadd.f32 %v289, %v1760
  %v1762 = vpop.f32.mrb[0].mxu0
  %1763 = vmatprep.mubr.f32.mxu0 0.0
  %1764 = vmatmul.mubr.f32.gmra.mrb[0].mxu0 %v674
  %v1765 = vpop.f32.mrb[0].mxu0
  %v1766 = vadd.f32 %v289, %v1765
  %v1767 = vpop.f32.mrb[0].mxu0
  %1768 = vmatprep.mubr.f32.mxu0 0.0
  %1769 = vmatmul.mubr.f32.gmra.mrb[0].mxu0 %v677
  %v1770 = vpop.f32.mrb[0].mxu0
  %v1771 = vadd.f32 %v289, %v1770
  %v1772 = vpop.f32.mrb[0].mxu0
  %1773 = vmatprep.mubr.f32.mxu0 0.0
  %1774 = vmatmul.mubr.f32.gmra.mrb[0].mxu0 %v680
  %v1775 = vpop.f32.mrb[0].mxu0
  %v1776 = vadd.f32 %v289, %v1775
  %v1777 = vpop.f32.mrb[0].mxu0
  %1778 = vmatprep.mubr.f32.mxu0 0.0
  %1779 = vmatmul.mubr.f32.gmra.mrb[0].mxu0 %v683
  %v1780 = vpop.f32.mrb[0].mxu0
  %v1781 = vadd.f32 %v289, %v1780
  %v1782 = vpop.f32.mrb[0].mxu0
  %1783 = vmatprep.mubr.f32.mxu0 0.0
  %1784 = vmatmul.mubr.f32.gmra.mrb[0].mxu0 %v686
  %v1785 = vpop.f32.mrb[0].mxu0
  %v1786 = vadd.f32 %v289, %v1785
  %v1787 = vpop.f32.mrb[0].mxu0
  %1788 = vmatprep.mubr.f32.mxu0 0.0
  %1789 = vmatmul.mubr.f32.gmra.mrb[0].mxu0 %v689
  %v1790 = vpop.f32.mrb[0].mxu0
  %v1791 = vadd.f32 %v289, %v1790
  %v1792 = vpop.f32.mrb[0].mxu0
  %1793 = vmatprep.mubr.f32.mxu0 0.0
  %1794 = vmatmul.mubr.f32.gmra.mrb[0].mxu0 %v692
  %v1795 = vpop.f32.mrb[0].mxu0
  %v1796 = vadd.f32 %v289, %v1795
  %v1797 = vpop.f32.mrb[0].mxu0
  %1798 = vmatprep.mubr.f32.mxu0 0.0
  %1799 = vmatmul.mubr.f32.gmra.mrb[0].mxu0 %v695
  %v1800 = vpop.f32.mrb[0].mxu0
  %v1801 = vadd.f32 %v289, %v1800
  %v1802 = vpop.f32.mrb[0].mxu0
  %1803 = vmatprep.mubr.f32.mxu0 0.0
  %1804 = vmatmul.mubr.f32.gmra.mrb[0].mxu0 %v698
  %v1805 = vpop.f32.mrb[0].mxu0
  %v1806 = vadd.f32 %v289, %v1805
  %v1807 = vpop.f32.mrb[0].mxu0
  %1808 = vmatprep.mubr.f32.mxu0 0.0
  %1809 = vmatmul.mubr.f32.gmra.mrb[0].mxu0 %v701
  %v1810 = vpop.f32.mrb[0].mxu0
  %v1811 = vadd.f32 %v289, %v1810
  %v1812 = vpop.f32.mrb[0].mxu0
  %1813 = vmatprep.mubr.f32.mxu0 0.0
  %1814 = vmatmul.mubr.f32.gmra.mrb[0].mxu0 %v704
  %v1815 = vpop.f32.mrb[0].mxu0
  %v1816 = vadd.f32 %v289, %v1815
  %v1817 = vpop.f32.mrb[0].mxu0
  %1818 = vmatprep.mubr.f32.mxu0 0.0
  %1819 = vmatmul.mubr.f32.gmra.mrb[0].mxu0 %v707
  %v1820 = vpop.f32.mrb[0].mxu0
  %v1821 = vadd.f32 %v289, %v1820
  %v1822 = vpop.f32.mrb[0].mxu0
  %1823 = vmatprep.mubr.f32.mxu0 0.0
  %1824 = vmatmul.mubr.f32.gmra.mrb[0].mxu0 %v710
  %v1825 = vpop.f32.mrb[0].mxu0
  %v1826 = vadd.f32 %v289, %v1825
  %v1827 = vpop.f32.mrb[0].mxu0
  %1828 = vmatprep.mubr.f32.mxu0 0.0
  %1829 = vmatmul.mubr.f32.gmra.mrb[0].mxu0 %v713
  %v1830 = vpop.f32.mrb[0].mxu0
  %v1831 = vadd.f32 %v289, %v1830
  %v1832 = vpop.f32.mrb[0].mxu0
  %1833 = vmatprep.mubr.f32.mxu0 0.0
  %1834 = vmatmul.mubr.f32.gmra.mrb[0].mxu0 %v716
  %v1835 = vpop.f32.mrb[0].mxu0
  %v1836 = vadd.f32 %v289, %v1835
  %v1837 = vpop.f32.mrb[0].mxu0
  %1838 = vmatprep.mubr.f32.mxu0 0.0
  %1839 = vmatmul.mubr.f32.gmra.mrb[0].mxu0 %v719
  %v1840 = vpop.f32.mrb[0].mxu0
  %v1841 = vadd.f32 %v289, %v1840
  %v1842 = vpop.f32.mrb[0].mxu0
  %1843 = vmatprep.mubr.f32.mxu0 0.0
  %1844 = vmatmul.mubr.f32.gmra.mrb[0].mxu0 %v722
  %v1845 = vpop.f32.mrb[0].mxu0
  %v1846 = vadd.f32 %v289, %v1845
  %v1847 = vpop.f32.mrb[0].mxu0
  %1848 = vmatprep.mubr.f32.mxu0 0.0
  %1849 = vmatmul.mubr.f32.gmra.mrb[0].mxu0 %v725
  %v1850 = vpop.f32.mrb[0].mxu0
  %v1851 = vadd.f32 %v289, %v1850
  %v1852 = vpop.f32.mrb[0].mxu0
  %1853 = vmatprep.mubr.f32.mxu0 0.0
  %1854 = vmatmul.mubr.f32.gmra.mrb[0].mxu0 %v728
  %v1855 = vpop.f32.mrb[0].mxu0
  %v1856 = vadd.f32 %v289, %v1855
  %v1857 = vpop.f32.mrb[0].mxu0
  %1858 = vmatprep.mubr.f32.mxu0 0.0
  %1859 = vmatmul.mubr.f32.gmra.mrb[0].mxu0 %v731
  %v1860 = vpop.f32.mrb[0].mxu0
  %v1861 = vadd.f32 %v289, %v1860
  %v1862 = vpop.f32.mrb[0].mxu0
  %1863 = vmatprep.mubr.f32.mxu0 0.0
  %1864 = vmatmul.mubr.f32.gmra.mrb[0].mxu0 %v734
  %v1865 = vpop.f32.mrb[0].mxu0
  %v1866 = vadd.f32 %v289, %v1865
  %v1867 = vpop.f32.mrb[0].mxu0
  %1868 = vmatprep.mubr.f32.mxu0 0.0
  %1869 = vmatmul.mubr.f32.gmra.mrb[0].mxu0 %v737
  %v1870 = vpop.f32.mrb[0].mxu0
  %v1871 = vadd.f32 %v289, %v1870
  %v1872 = vpop.f32.mrb[0].mxu0
  %1873 = vmatprep.mubr.f32.mxu0 0.0
  %1874 = vmatmul.mubr.f32.gmra.mrb[0].mxu0 %v740
  %v1875 = vpop.f32.mrb[0].mxu0
  %v1876 = vadd.f32 %v289, %v1875
  %v1877 = vpop.f32.mrb[0].mxu0
  %1878 = vmatprep.mubr.f32.mxu0 0.0
  %1879 = vmatmul.mubr.f32.gmra.mrb[0].mxu0 %v743
  %v1880 = vpop.f32.mrb[0].mxu0
  %v1881 = vadd.f32 %v289, %v1880
  %v1882 = vpop.f32.mrb[0].mxu0
  %1883 = vmatprep.mubr.f32.mxu0 0.0
  %1884 = vmatmul.mubr.f32.gmra.mrb[0].mxu0 %v746
  %v1885 = vpop.f32.mrb[0].mxu0
  %v1886 = vadd.f32 %v289, %v1885
  %v1887 = vpop.f32.mrb[0].mxu0
  %1888 = vmatprep.mubr.f32.mxu0 0.0
  %1889 = vmatmul.mubr.f32.gmra.mrb[0].mxu0 %v749
  %v1890 = vpop.f32.mrb[0].mxu0
  %v1891 = vadd.f32 %v289, %v1890
  %v1892 = vpop.f32.mrb[0].mxu0
  %1893 = vmatprep.mubr.f32.mxu0 0.0
  %1894 = vmatmul.mubr.f32.gmra.mrb[0].mxu0 %v752
  %v1895 = vpop.f32.mrb[0].mxu0
  %v1896 = vadd.f32 %v289, %v1895
  %v1897 = vpop.f32.mrb[0].mxu0
  %1898 = vmatprep.mubr.f32.mxu0 0.0
  %1899 = vmatmul.mubr.f32.gmra.mrb[0].mxu0 %v755
  %v1900 = vpop.f32.mrb[0].mxu0
  %v1901 = vadd.f32 %v289, %v1900
  %v1902 = vpop.f32.mrb[0].mxu0
  %1903 = vmatprep.mubr.f32.mxu0 0.0
  %1904 = vmatmul.mubr.f32.gmra.mrb[0].mxu0 %v758
  %v1905 = vpop.f32.mrb[0].mxu0
  %v1906 = vadd.f32 %v289, %v1905
  %v1907 = vpop.f32.mrb[0].mxu0
  %1908 = vmatprep.mubr.f32.mxu0 0.0
  %1909 = vmatmul.mubr.f32.gmra.mrb[0].mxu0 %v761
  %v1910 = vpop.f32.mrb[0].mxu0
  %v1911 = vadd.f32 %v289, %v1910
  %v1912 = vpop.f32.mrb[0].mxu0
  %1913 = vmatprep.mubr.f32.mxu0 0.0
  %1914 = vmatmul.mubr.f32.gmra.mrb[0].mxu0 %v764
  %v1915 = vpop.f32.mrb[0].mxu0
  %v1916 = vadd.f32 %v289, %v1915
  %v1917 = vpop.f32.mrb[0].mxu0
  %1918 = vmatprep.mubr.f32.mxu0 0.0
  %1919 = vmatmul.mubr.f32.gmra.mrb[0].mxu0 %v767
  %v1920 = vpop.f32.mrb[0].mxu0
  %v1921 = vadd.f32 %v289, %v1920
  %v1922 = vpop.f32.mrb[0].mxu0
  %1923 = vmatprep.mubr.f32.mxu0 0.0
  %1924 = vmatmul.mubr.f32.gmra.mrb[0].mxu0 %v770
  %v1925 = vpop.f32.mrb[0].mxu0
  %v1926 = vadd.f32 %v289, %v1925
  %v1927 = vpop.f32.mrb[0].mxu0
  %1928 = vmatprep.mubr.f32.mxu0 0.0
  %1929 = vmatmul.mubr.f32.gmra.mrb[0].mxu0 %v773
  %v1930 = vpop.f32.mrb[0].mxu0
  %v1931 = vadd.f32 %v289, %v1930
  %v1932 = vpop.f32.mrb[0].mxu0
  %1933 = vmatprep.mubr.f32.mxu0 0.0
  %1934 = vmatmul.mubr.f32.gmra.mrb[0].mxu0 %v776
  %v1935 = vpop.f32.mrb[0].mxu0
  %v1936 = vadd.f32 %v289, %v1935
  %v1937 = vpop.f32.mrb[0].mxu0
  %1938 = vmatprep.mubr.f32.mxu0 0.0
  %1939 = vmatmul.mubr.f32.gmra.mrb[0].mxu0 %v779
  %v1940 = vpop.f32.mrb[0].mxu0
  %v1941 = vadd.f32 %v289, %v1940
  %v1942 = vpop.f32.mrb[0].mxu0
  %1943 = vmatprep.mubr.f32.mxu0 0.0
  %1944 = vmatmul.mubr.f32.gmra.mrb[0].mxu0 %v782
  %v1945 = vpop.f32.mrb[0].mxu0
  %v1946 = vadd.f32 %v289, %v1945
  %v1947 = vpop.f32.mrb[0].mxu0
  %1948 = vmatprep.mubr.f32.mxu0 0.0
  %1949 = vmatmul.mubr.f32.gmra.mrb[0].mxu0 %v785
  %v1950 = vpop.f32.mrb[0].mxu0
  %v1951 = vadd.f32 %v289, %v1950
  %v1952 = vpop.f32.mrb[0].mxu0
  %1953 = vmatprep.mubr.f32.mxu0 0.0
  %1954 = vmatmul.mubr.f32.gmra.mrb[0].mxu0 %v788
  %v1955 = vpop.f32.mrb[0].mxu0
  %v1956 = vadd.f32 %v289, %v1955
  %v1957 = vpop.f32.mrb[0].mxu0
  %1958 = vmatprep.mubr.f32.mxu0 0.0
  %1959 = vmatmul.mubr.f32.gmra.mrb[0].mxu0 %v791
  %v1960 = vpop.f32.mrb[0].mxu0
  %v1961 = vadd.f32 %v289, %v1960
  %v1962 = vpop.f32.mrb[0].mxu0
  %1963 = vmatprep.mubr.f32.mxu0 0.0
  %1964 = vmatmul.mubr.f32.gmra.mrb[0].mxu0 %v794
  %v1965 = vpop.f32.mrb[0].mxu0
  %v1966 = vadd.f32 %v289, %v1965
  %v1967 = vpop.f32.mrb[0].mxu0
  %1968 = vmatprep.mubr.f32.mxu0 0.0
  %1969 = vmatmul.mubr.f32.gmra.mrb[0].mxu0 %v797
  %v1970 = vpop.f32.mrb[0].mxu0
  %v1971 = vadd.f32 %v289, %v1970
  %v1972 = vpop.f32.mrb[0].mxu0
  %1973 = vmatprep.mubr.f32.mxu0 0.0
  %1974 = vmatmul.mubr.f32.gmra.mrb[0].mxu0 %v800
  %v1975 = vpop.f32.mrb[0].mxu0
  %v1976 = vadd.f32 %v289, %v1975
  %v1977 = vpop.f32.mrb[0].mxu0
  %1978 = vmatprep.mubr.f32.mxu0 0.0
  %1979 = vmatmul.mubr.f32.gmra.mrb[0].mxu0 %v803
  %v1980 = vpop.f32.mrb[0].mxu0
  %v1981 = vadd.f32 %v289, %v1980
  %v1982 = vpop.f32.mrb[0].mxu0
  %1983 = vmatprep.mubr.f32.mxu0 0.0
  %1984 = vmatmul.mubr.f32.gmra.mrb[0].mxu0 %v806
  %v1985 = vpop.f32.mrb[0].mxu0
  %v1986 = vadd.f32 %v289, %v1985
  %v1987 = vpop.f32.mrb[0].mxu0
  %1988 = vmatprep.mubr.f32.mxu0 0.0
  %1989 = vmatmul.mubr.f32.gmra.mrb[0].mxu0 %v809
  %v1990 = vpop.f32.mrb[0].mxu0
  %v1991 = vadd.f32 %v289, %v1990
  %v1992 = vpop.f32.mrb[0].mxu0
  %1993 = vmatprep.mubr.f32.mxu0 0.0
  %1994 = vmatmul.mubr.f32.gmra.mrb[0].mxu0 %v812
  %v1995 = vpop.f32.mrb[0].mxu0
  %v1996 = vadd.f32 %v289, %v1995
  %v1997 = vpop.f32.mrb[0].mxu0
  %1998 = vmatprep.mubr.f32.mxu0 0.0
  %1999 = vmatmul.mubr.f32.gmra.mrb[0].mxu0 %v815
  %v2000 = vpop.f32.mrb[0].mxu0
  %v2001 = vadd.f32 %v289, %v2000
  %v2002 = vpop.f32.mrb[0].mxu0
  %2003 = vmatprep.mubr.f32.mxu0 0.0
  %2004 = vmatmul.mubr.f32.gmra.mrb[0].mxu0 %v818
  %v2005 = vpop.f32.mrb[0].mxu0
  %v2006 = vadd.f32 %v289, %v2005
  %v2007 = vpop.f32.mrb[0].mxu0
  %2008 = vmatprep.mubr.f32.mxu0 0.0
  %2009 = vmatmul.mubr.f32.gmra.mrb[0].mxu0 %v821
  %v2010 = vpop.f32.mrb[0].mxu0
  %v2011 = vadd.f32 %v289, %v2010
  %v2012 = vpop.f32.mrb[0].mxu0
  %2013 = vmatprep.mubr.f32.mxu0 0.0
  %2014 = vmatmul.mubr.f32.gmra.mrb[0].mxu0 %v824
  %v2015 = vpop.f32.mrb[0].mxu0
  %v2016 = vadd.f32 %v289, %v2015
  %v2017 = vpop.f32.mrb[0].mxu0
  %2018 = vmatprep.mubr.f32.mxu0 0.0
  %2019 = vmatmul.mubr.f32.gmra.mrb[0].mxu0 %v827
  %v2020 = vpop.f32.mrb[0].mxu0
  %v2021 = vadd.f32 %v289, %v2020
  %v2022 = vpop.f32.mrb[0].mxu0
  %2023 = vmatprep.mubr.f32.mxu0 0.0
  %2024 = vmatmul.mubr.f32.gmra.mrb[0].mxu0 %v830
  %v2025 = vpop.f32.mrb[0].mxu0
  %v2026 = vadd.f32 %v289, %v2025
  %v2027 = vpop.f32.mrb[0].mxu0
  %2028 = vmatprep.mubr.f32.mxu0 0.0
  %2029 = vmatmul.mubr.f32.gmra.mrb[0].mxu0 %v833
  %v2030 = vpop.f32.mrb[0].mxu0
  %v2031 = vadd.f32 %v289, %v2030
  %v2032 = vpop.f32.mrb[0].mxu0
  %2033 = vmatprep.mubr.f32.mxu0 0.0
  %2034 = vmatmul.mubr.f32.gmra.mrb[0].mxu0 %v836
  %v2035 = vpop.f32.mrb[0].mxu0
  %v2036 = vadd.f32 %v289, %v2035
  %v2037 = vpop.f32.mrb[0].mxu0
  %2038 = vmatprep.mubr.f32.mxu0 0.0
  %2039 = vmatmul.mubr.f32.gmra.mrb[0].mxu0 %v839
  %v2040 = vpop.f32.mrb[0].mxu0
  %v2041 = vadd.f32 %v289, %v2040
  %v2042 = vpop.f32.mrb[0].mxu0
  %2043 = vmatprep.mubr.f32.mxu0 0.0
  %2044 = vmatmul.mubr.f32.gmra.mrb[0].mxu0 %v842
  %v2045 = vpop.f32.mrb[0].mxu0
  %v2046 = vadd.f32 %v289, %v2045
  %v2047 = vpop.f32.mrb[0].mxu0
  %2048 = vmatprep.mubr.f32.mxu0 0.0
  %2049 = vmatmul.mubr.f32.gmra.mrb[0].mxu0 %v845
  %v2050 = vpop.f32.mrb[0].mxu0
  %v2051 = vadd.f32 %v289, %v2050
  %v2052 = vpop.f32.mrb[0].mxu0
  %2053 = vmatprep.mubr.f32.mxu0 0.0
  %2054 = vmatmul.mubr.f32.gmra.mrb[0].mxu0 %v848
  %v2055 = vpop.f32.mrb[0].mxu0
  %v2056 = vadd.f32 %v289, %v2055
  %v2057 = vpop.f32.mrb[0].mxu0
  %2058 = vmatprep.mubr.f32.mxu0 0.0
  %2059 = vmatmul.mubr.f32.gmra.mrb[0].mxu0 %v851
  %v2060 = vpop.f32.mrb[0].mxu0
  %v2061 = vadd.f32 %v289, %v2060
  %v2062 = vpop.f32.mrb[0].mxu0
  %2063 = vmatprep.mubr.f32.mxu0 0.0
  %2064 = vmatmul.mubr.f32.gmra.mrb[0].mxu0 %v854
  %v2065 = vpop.f32.mrb[0].mxu0
  %v2066 = vadd.f32 %v289, %v2065
  %v2067 = vpop.f32.mrb[0].mxu0
  %2068 = vmatprep.mubr.f32.mxu0 0.0
  %2069 = vmatmul.mubr.f32.gmra.mrb[0].mxu0 %v857
  %v2070 = vpop.f32.mrb[0].mxu0
  %v2071 = vadd.f32 %v289, %v2070
  %v2072 = vpop.f32.mrb[0].mxu0
  %2073 = vmatprep.mubr.f32.mxu0 0.0
  %2074 = vmatmul.mubr.f32.gmra.mrb[0].mxu0 %v860
  %v2075 = vpop.f32.mrb[0].mxu0
  %v2076 = vadd.f32 %v289, %v2075
  %v2077 = vpop.f32.mrb[0].mxu0
  %2078 = vmatprep.mubr.f32.mxu0 0.0
  %2079 = vmatmul.mubr.f32.gmra.mrb[0].mxu0 %v863
  %v2080 = vpop.f32.mrb[0].mxu0
  %v2081 = vadd.f32 %v289, %v2080
  %v2082 = vpop.f32.mrb[0].mxu0
  %2083 = vmatprep.mubr.f32.mxu0 0.0
  %2084 = vmatmul.mubr.f32.gmra.mrb[0].mxu0 %v866
  %v2085 = vpop.f32.mrb[0].mxu0
  %v2086 = vadd.f32 %v289, %v2085
  %v2087 = vpop.f32.mrb[0].mxu0
  %2088 = vmatprep.mubr.f32.mxu0 0.0
  %2089 = vmatmul.mubr.f32.gmra.mrb[0].mxu0 %v869
  %v2090 = vpop.f32.mrb[0].mxu0
  %v2091 = vadd.f32 %v289, %v2090
  %v2092 = vpop.f32.mrb[0].mxu0
  %2093 = vmatprep.mubr.f32.mxu0 0.0
  %2094 = vmatmul.mubr.f32.gmra.mrb[0].mxu0 %v872
  %v2095 = vpop.f32.mrb[0].mxu0
  %v2096 = vadd.f32 %v289, %v2095
  %v2097 = vpop.f32.mrb[0].mxu0
  %2098 = vmatprep.mubr.f32.mxu0 0.0
  %2099 = vmatmul.mubr.f32.gmra.mrb[0].mxu0 %v875
  %v2100 = vpop.f32.mrb[0].mxu0
  %v2101 = vadd.f32 %v289, %v2100
  %v2102 = vpop.f32.mrb[0].mxu0
  %2103 = vmatprep.mubr.f32.mxu0 0.0
  %2104 = vmatmul.mubr.f32.gmra.mrb[0].mxu0 %v878
  %v2105 = vpop.f32.mrb[0].mxu0
  %v2106 = vadd.f32 %v289, %v2105
  %v2107 = vpop.f32.mrb[0].mxu0
  %2108 = vmatprep.mubr.f32.mxu0 0.0
  %2109 = vmatmul.mubr.f32.gmra.mrb[0].mxu0 %v881
  %v2110 = vpop.f32.mrb[0].mxu0
  %v2111 = vadd.f32 %v289, %v2110
  %v2112 = vpop.f32.mrb[0].mxu0
  %2113 = vmatprep.mubr.f32.mxu0 0.0
  %2114 = vmatmul.mubr.f32.gmra.mrb[0].mxu0 %v884
  %v2115 = vpop.f32.mrb[0].mxu0
  %v2116 = vadd.f32 %v289, %v2115
  %v2117 = vpop.f32.mrb[0].mxu0
  %2118 = vmatprep.mubr.f32.mxu0 0.0
  %2119 = vmatmul.mubr.f32.gmra.mrb[0].mxu0 %v887
  %v2120 = vpop.f32.mrb[0].mxu0
  %v2121 = vadd.f32 %v289, %v2120
  %v2122 = vpop.f32.mrb[0].mxu0
  %2123 = vmatprep.mubr.f32.mxu0 0.0
  %2124 = vmatmul.mubr.f32.gmra.mrb[0].mxu0 %v890
  %v2125 = vpop.f32.mrb[0].mxu0
  %v2126 = vadd.f32 %v289, %v2125
  %v2127 = vpop.f32.mrb[0].mxu0
  %2128 = vmatprep.mubr.f32.mxu0 0.0
  %2129 = vmatmul.mubr.f32.gmra.mrb[0].mxu0 %v893
  %v2130 = vpop.f32.mrb[0].mxu0
  %v2131 = vadd.f32 %v289, %v2130
  %v2132 = vpop.f32.mrb[0].mxu0
  %2133 = vmatprep.mubr.f32.mxu0 0.0
  %2134 = vmatmul.mubr.f32.gmra.mrb[0].mxu0 %v896
  %v2135 = vpop.f32.mrb[0].mxu0
  %v2136 = vadd.f32 %v289, %v2135
  %v2137 = vpop.f32.mrb[0].mxu0
  %2138 = vmatprep.mubr.f32.mxu0 0.0
  %2139 = vmatmul.mubr.f32.gmra.mrb[0].mxu0 %v899
  %v2140 = vpop.f32.mrb[0].mxu0
  %v2141 = vadd.f32 %v289, %v2140
  %v2142 = vpop.f32.mrb[0].mxu0
  %2143 = vmatprep.mubr.f32.mxu0 0.0
  %2144 = vmatmul.mubr.f32.gmra.mrb[0].mxu0 %v902
  %v2145 = vpop.f32.mrb[0].mxu0
  %v2146 = vadd.f32 %v289, %v2145
  %v2147 = vpop.f32.mrb[0].mxu0
  %2148 = vmatprep.mubr.f32.mxu0 0.0
  %2149 = vmatmul.mubr.f32.gmra.mrb[0].mxu0 %v905
  %v2150 = vpop.f32.mrb[0].mxu0
  %v2151 = vadd.f32 %v289, %v2150
  %v2152 = vpop.f32.mrb[0].mxu0
  %2153 = vmatprep.mubr.f32.mxu0 0.0
  %2154 = vmatmul.mubr.f32.gmra.mrb[0].mxu0 %v908
  %v2155 = vpop.f32.mrb[0].mxu0
  %v2156 = vadd.f32 %v289, %v2155
  %v2157 = vpop.f32.mrb[0].mxu0
  %2158 = vmatprep.mubr.f32.mxu0 0.0
  %2159 = vmatmul.mubr.f32.gmra.mrb[0].mxu0 %v911
  %v2160 = vpop.f32.mrb[0].mxu0
  %v2161 = vadd.f32 %v289, %v2160
  %v2162 = vpop.f32.mrb[0].mxu0
  %2163 = vmatprep.mubr.f32.mxu0 0.0
  %2164 = vmatmul.mubr.f32.gmra.mrb[0].mxu0 %v914
  %v2165 = vpop.f32.mrb[0].mxu0
  %v2166 = vadd.f32 %v289, %v2165
  %v2167 = vpop.f32.mrb[0].mxu0
  %2168 = vmatprep.mubr.f32.mxu0 0.0
  %2169 = vmatmul.mubr.f32.gmra.mrb[0].mxu0 %v917
  %v2170 = vpop.f32.mrb[0].mxu0
  %v2171 = vadd.f32 %v289, %v2170
  %v2172 = vpop.f32.mrb[0].mxu0
  %2173 = vmatprep.mubr.f32.mxu0 0.0
  %2174 = vmatmul.mubr.f32.gmra.mrb[0].mxu0 %v920
  %v2175 = vpop.f32.mrb[0].mxu0
  %v2176 = vadd.f32 %v289, %v2175
  %v2177 = vpop.f32.mrb[0].mxu0
  %2178 = vmatprep.mubr.f32.mxu0 0.0
  %2179 = vmatmul.mubr.f32.gmra.mrb[0].mxu0 %v923
  %v2180 = vpop.f32.mrb[0].mxu0
  %v2181 = vadd.f32 %v289, %v2180
  %v2182 = vpop.f32.mrb[0].mxu0
  %2183 = vmatprep.mubr.f32.mxu0 0.0
  %2184 = vmatmul.mubr.f32.gmra.mrb[0].mxu0 %v926
  %v2185 = vpop.f32.mrb[0].mxu0
  %v2186 = vadd.f32 %v289, %v2185
  %v2187 = vpop.f32.mrb[0].mxu0
  %2188 = vmatprep.mubr.f32.mxu0 0.0
  %2189 = vmatmul.mubr.f32.gmra.mrb[0].mxu0 %v929
  %v2190 = vpop.f32.mrb[0].mxu0
  %v2191 = vadd.f32 %v289, %v2190
  %v2192 = vpop.f32.mrb[0].mxu0
  %2193 = vmatprep.mubr.f32.mxu0 0.0
  %2194 = vmatmul.mubr.f32.gmra.mrb[0].mxu0 %v932
  %v2195 = vpop.f32.mrb[0].mxu0
  %v2196 = vadd.f32 %v289, %v2195
  %v2197 = vpop.f32.mrb[0].mxu0
  %2198 = vmatprep.mubr.f32.mxu0 0.0
  %2199 = vmatmul.mubr.f32.gmra.mrb[0].mxu0 %v935
  %v2200 = vpop.f32.mrb[0].mxu0
  %v2201 = vadd.f32 %v289, %v2200
  %v2202 = vpop.f32.mrb[0].mxu0
  %2203 = vmatprep.mubr.f32.mxu0 0.0
  %2204 = vmatmul.mubr.f32.gmra.mrb[0].mxu0 %v938
  %v2205 = vpop.f32.mrb[0].mxu0
  %v2206 = vadd.f32 %v289, %v2205
  %v2207 = vpop.f32.mrb[0].mxu0
  %2208 = vmatprep.mubr.f32.mxu0 0.0
  %2209 = vmatmul.mubr.f32.gmra.mrb[0].mxu0 %v941
  %v2210 = vpop.f32.mrb[0].mxu0
  %v2211 = vadd.f32 %v289, %v2210
  %v2212 = vpop.f32.mrb[0].mxu0
  %2213 = vmatprep.mubr.f32.mxu0 0.0
  %2214 = vmatmul.mubr.f32.gmra.mrb[0].mxu0 %v944
  %v2215 = vpop.f32.mrb[0].mxu0
  %v2216 = vadd.f32 %v289, %v2215
  %v2217 = vpop.f32.mrb[0].mxu0
  %2218 = vmatprep.mubr.f32.mxu0 0.0
  %2219 = vmatmul.mubr.f32.gmra.mrb[0].mxu0 %v947
  %v2220 = vpop.f32.mrb[0].mxu0
  %v2221 = vadd.f32 %v289, %v2220
  %v2222 = vpop.f32.mrb[0].mxu0
  %2223 = vmatprep.mubr.f32.mxu0 0.0
  %2224 = vmatmul.mubr.f32.gmra.mrb[0].mxu0 %v950
  %v2225 = vpop.f32.mrb[0].mxu0
  %v2226 = vadd.f32 %v289, %v2225
  %v2227 = vpop.f32.mrb[0].mxu0
  %2228 = vmatprep.mubr.f32.mxu0 0.0
  %2229 = vmatmul.mubr.f32.gmra.mrb[0].mxu0 %v953
  %v2230 = vpop.f32.mrb[0].mxu0
  %v2231 = vadd.f32 %v289, %v2230
  %v2232 = vpop.f32.mrb[0].mxu0
  %2233 = vmatprep.mubr.f32.mxu0 0.0
  %2234 = vmatmul.mubr.f32.gmra.mrb[0].mxu0 %v956
  %v2235 = vpop.f32.mrb[0].mxu0
  %v2236 = vadd.f32 %v289, %v2235
  %v2237 = vpop.f32.mrb[0].mxu0
  %2238 = vmatprep.mubr.f32.mxu0 0.0
  %2239 = vmatmul.mubr.f32.gmra.mrb[0].mxu0 %v959
  %v2240 = vpop.f32.mrb[0].mxu0
  %v2241 = vadd.f32 %v289, %v2240
  %v2242 = vpop.f32.mrb[0].mxu0
  %2243 = vmatprep.mubr.f32.mxu0 0.0
  %2244 = vmatmul.mubr.f32.gmra.mrb[0].mxu0 %v962
  %v2245 = vpop.f32.mrb[0].mxu0
  %v2246 = vadd.f32 %v289, %v2245
  %v2247 = vpop.f32.mrb[0].mxu0
  %2248 = vmatprep.mubr.f32.mxu0 0.0
  %2249 = vmatmul.mubr.f32.gmra.mrb[0].mxu0 %v965
  %v2250 = vpop.f32.mrb[0].mxu0
  %v2251 = vadd.f32 %v289, %v2250
  %v2252 = vpop.f32.mrb[0].mxu0
  %2253 = vmatprep.mubr.f32.mxu0 0.0
  %2254 = vmatmul.mubr.f32.gmra.mrb[0].mxu0 %v968
  %v2255 = vpop.f32.mrb[0].mxu0
  %v2256 = vadd.f32 %v289, %v2255
  %v2257 = vpop.f32.mrb[0].mxu0
  %2258 = vmatprep.mubr.f32.mxu0 0.0
  %2259 = vmatmul.mubr.f32.gmra.mrb[0].mxu0 %v971
  %v2260 = vpop.f32.mrb[0].mxu0
  %v2261 = vadd.f32 %v289, %v2260
  %v2262 = vpop.f32.mrb[0].mxu0
  %2263 = vmatprep.mubr.f32.mxu0 0.0
  %2264 = vmatmul.mubr.f32.gmra.mrb[0].mxu0 %v974
  %v2265 = vpop.f32.mrb[0].mxu0
  %v2266 = vadd.f32 %v289, %v2265
  %v2267 = vpop.f32.mrb[0].mxu0
  %2268 = vmatprep.mubr.f32.mxu0 0.0
  %2269 = vmatmul.mubr.f32.gmra.mrb[0].mxu0 %v977
  %v2270 = vpop.f32.mrb[0].mxu0
  %v2271 = vadd.f32 %v289, %v2270
  %v2272 = vpop.f32.mrb[0].mxu0
  %2273 = vmatprep.mubr.f32.mxu0 0.0
  %2274 = vmatmul.mubr.f32.gmra.mrb[0].mxu0 %v980
  %v2275 = vpop.f32.mrb[0].mxu0
  %v2276 = vadd.f32 %v289, %v2275
  %v2277 = vpop.f32.mrb[0].mxu0
  %2278 = vmatprep.mubr.f32.mxu0 0.0
  %2279 = vmatmul.mubr.f32.gmra.mrb[0].mxu0 %v983
  %v2280 = vpop.f32.mrb[0].mxu0
  %v2281 = vadd.f32 %v289, %v2280
  %v2282 = vpop.f32.mrb[0].mxu0
  %2283 = vmatprep.mubr.f32.mxu0 0.0
  %2284 = vmatmul.mubr.f32.gmra.mrb[0].mxu0 %v986
  %v2285 = vpop.f32.mrb[0].mxu0
  %v2286 = vadd.f32 %v289, %v2285
  %v2287 = vpop.f32.mrb[0].mxu0
  %2288 = vmatprep.mubr.f32.mxu0 0.0
  %2289 = vmatmul.mubr.f32.gmra.mrb[0].mxu0 %v989
  %v2290 = vpop.f32.mrb[0].mxu0
  %v2291 = vadd.f32 %v289, %v2290
  %v2292 = vpop.f32.mrb[0].mxu0
  %2293 = vmatprep.mubr.f32.mxu0 0.0
  %2294 = vmatmul.mubr.f32.gmra.mrb[0].mxu0 %v992
  %v2295 = vpop.f32.mrb[0].mxu0
  %v2296 = vadd.f32 %v289, %v2295
  %v2297 = vpop.f32.mrb[0].mxu0
  %2298 = vmatprep.mubr.f32.mxu0 0.0
  %2299 = vmatmul.mubr.f32.gmra.mrb[0].mxu0 %v995
  %v2300 = vpop.f32.mrb[0].mxu0
  %v2301 = vadd.f32 %v289, %v2300
  %v2302 = vpop.f32.mrb[0].mxu0
  %2303 = vmatprep.mubr.f32.mxu0 0.0
  %2304 = vmatmul.mubr.f32.gmra.mrb[0].mxu0 %v998
  %v2305 = vpop.f32.mrb[0].mxu0
  %v2306 = vadd.f32 %v289, %v2305
  %v2307 = vpop.f32.mrb[0].mxu0
  %2308 = vmatprep.mubr.f32.mxu0 0.0
  %2309 = vmatmul.mubr.f32.gmra.mrb[0].mxu0 %v1001
  %v2310 = vpop.f32.mrb[0].mxu0
  %v2311 = vadd.f32 %v289, %v2310
  %v2312 = vpop.f32.mrb[0].mxu0
  %2313 = vmatprep.mubr.f32.mxu0 0.0
  %2314 = vmatmul.mubr.f32.gmra.mrb[0].mxu0 %v1004
  %v2315 = vpop.f32.mrb[0].mxu0
  %v2316 = vadd.f32 %v289, %v2315
  %v2317 = vpop.f32.mrb[0].mxu0
  %2318 = vmatprep.mubr.f32.mxu0 0.0
  %2319 = vmatmul.mubr.f32.gmra.mrb[0].mxu0 %v1007
  %v2320 = vpop.f32.mrb[0].mxu0
  %v2321 = vadd.f32 %v289, %v2320
  %v2322 = vpop.f32.mrb[0].mxu0
  %2323 = vmatprep.mubr.f32.mxu0 0.0
  %2324 = vmatmul.mubr.f32.gmra.mrb[0].mxu0 %v1010
  %v2325 = vpop.f32.mrb[0].mxu0
  %v2326 = vadd.f32 %v289, %v2325
  %v2327 = vpop.f32.mrb[0].mxu0
  %2328 = vmatprep.mubr.f32.mxu0 0.0
  %2329 = vmatmul.mubr.f32.gmra.mrb[0].mxu0 %v1013
  %v2330 = vpop.f32.mrb[0].mxu0
  %v2331 = vadd.f32 %v289, %v2330
  %v2332 = vpop.f32.mrb[0].mxu0
  %2333 = vmatprep.mubr.f32.mxu0 0.0
  %2334 = vmatmul.mubr.f32.gmra.mrb[0].mxu0 %v1016
  %v2335 = vpop.f32.mrb[0].mxu0
  %v2336 = vadd.f32 %v289, %v2335
  %v2337 = vpop.f32.mrb[0].mxu0
  %2338 = vmatprep.mubr.f32.mxu0 0.0
  %2339 = vmatmul.mubr.f32.gmra.mrb[0].mxu0 %v1019
  %v2340 = vpop.f32.mrb[0].mxu0
  %v2341 = vadd.f32 %v289, %v2340
  %v2342 = vpop.f32.mrb[0].mxu0
  %2343 = vmatprep.mubr.f32.mxu0 0.0
  %2344 = vmatmul.mubr.f32.gmra.mrb[0].mxu0 %v1022
  %v2345 = vpop.f32.mrb[0].mxu0
  %v2346 = vadd.f32 %v289, %v2345
  %v2347 = vpop.f32.mrb[0].mxu0
  %2348 = vmatprep.mubr.f32.mxu0 0.0
  %2349 = vmatmul.mubr.f32.gmra.mrb[0].mxu0 %v1025
  %v2350 = vpop.f32.mrb[0].mxu0
  %v2351 = vadd.f32 %v289, %v2350
  %v2352 = vpop.f32.mrb[0].mxu0
  %2353 = vmatprep.mubr.f32.mxu0 0.0
  %2354 = vmatmul.mubr.f32.gmra.mrb[0].mxu0 %v1028
  %v2355 = vpop.f32.mrb[0].mxu0
  %v2356 = vadd.f32 %v289, %v2355
  %v2357 = vpop.f32.mrb[0].mxu0
  %2358 = vmatprep.mubr.f32.mxu0 0.0
  %2359 = vmatmul.mubr.f32.gmra.mrb[0].mxu0 %v1031
  %v2360 = vpop.f32.mrb[0].mxu0
  %v2361 = vadd.f32 %v289, %v2360
  %v2362 = vpop.f32.mrb[0].mxu0
  %2363 = vmatprep.mubr.f32.mxu0 0.0
  %2364 = vmatmul.mubr.f32.gmra.mrb[0].mxu0 %v1034
  %v2365 = vpop.f32.mrb[0].mxu0
  %v2366 = vadd.f32 %v289, %v2365
  %v2367 = vpop.f32.mrb[0].mxu0
  %2368 = vmatprep.mubr.f32.mxu0 0.0
  %2369 = vmatmul.mubr.f32.gmra.mrb[0].mxu0 %v1037
  %v2370 = vpop.f32.mrb[0].mxu0
  %v2371 = vadd.f32 %v289, %v2370
  %v2372 = vpop.f32.mrb[0].mxu0
  %2373 = vmatprep.mubr.f32.mxu0 0.0
  %2374 = vmatmul.mubr.f32.gmra.mrb[0].mxu0 %v1040
  %v2375 = vpop.f32.mrb[0].mxu0
  %v2376 = vadd.f32 %v289, %v2375
  %v2377 = vpop.f32.mrb[0].mxu0
  %2378 = vmatprep.mubr.f32.mxu0 0.0
  %2379 = vmatmul.mubr.f32.gmra.mrb[0].mxu0 %v1043
  %v2380 = vpop.f32.mrb[0].mxu0
  %v2381 = vadd.f32 %v289, %v2380
  %v2382 = vpop.f32.mrb[0].mxu0
  %2383 = vmatprep.mubr.f32.mxu0 0.0
  %2384 = vmatmul.mubr.f32.gmra.mrb[0].mxu0 %v1046
  %v2385 = vpop.f32.mrb[0].mxu0
  %v2386 = vadd.f32 %v289, %v2385
  %v2387 = vpop.f32.mrb[0].mxu0
  %2388 = vmatprep.mubr.f32.mxu0 0.0
  %2389 = vmatmul.mubr.f32.gmra.mrb[0].mxu0 %v1049
  %v2390 = vpop.f32.mrb[0].mxu0
  %v2391 = vadd.f32 %v289, %v2390
  %v2392 = vpop.f32.mrb[0].mxu0
  %2393 = vmatprep.mubr.f32.mxu0 0.0
  %2394 = vmatmul.mubr.f32.gmra.mrb[0].mxu0 %v1052
  %v2395 = vpop.f32.mrb[0].mxu0
  %v2396 = vadd.f32 %v289, %v2395
  %v2397 = vpop.f32.mrb[0].mxu0
  %2398 = vmatprep.mubr.f32.mxu0 0.0
  %2399 = vmatmul.mubr.f32.gmra.mrb[0].mxu0 %v1055
  %v2400 = vpop.f32.mrb[0].mxu0
  %v2401 = vadd.f32 %v289, %v2400
  %v2402 = vpop.f32.mrb[0].mxu0
  %2403 = vmatprep.mubr.f32.mxu0 0.0
  %2404 = vmatmul.mubr.f32.gmra.mrb[0].mxu0 %v1058
  %v2405 = vpop.f32.mrb[0].mxu0
  %v2406 = vadd.f32 %v289, %v2405
  %v2407 = vpop.f32.mrb[0].mxu0
  %2408 = vdwg.mxu0
  %v2409 = vmax.f32 %v1131, 0.0
  %v2410 = vmax.f32 %v1136, 0.0
  %v2411 = vmax.f32 %v1141, 0.0
  %v2412 = vmax.f32 %v1146, 0.0
  %v2413 = vmax.f32 %v1151, 0.0
  %v2414 = vmax.f32 %v1156, 0.0
  %v2415 = vmax.f32 %v1161, 0.0
  %v2416 = vmax.f32 %v1166, 0.0
  %v2417 = vmax.f32 %v1171, 0.0
  %v2418 = vmax.f32 %v1176, 0.0
  %v2419 = vmax.f32 %v1181, 0.0
  %v2420 = vmax.f32 %v1186, 0.0
  %v2421 = vmax.f32 %v1191, 0.0
  %v2422 = vmax.f32 %v1196, 0.0
  %v2423 = vmax.f32 %v1201, 0.0
  %v2424 = vmax.f32 %v1206, 0.0
  %v2425 = vmax.f32 %v1211, 0.0
  %v2426 = vmax.f32 %v1216, 0.0
  %v2427 = vmax.f32 %v1221, 0.0
  %v2428 = vmax.f32 %v1226, 0.0
  %v2429 = vmax.f32 %v1231, 0.0
  %v2430 = vmax.f32 %v1236, 0.0
  %v2431 = vmax.f32 %v1241, 0.0
  %v2432 = vmax.f32 %v1246, 0.0
  %v2433 = vmax.f32 %v1251, 0.0
  %v2434 = vmax.f32 %v1256, 0.0
  %v2435 = vmax.f32 %v1261, 0.0
  %v2436 = vmax.f32 %v1266, 0.0
  %v2437 = vmax.f32 %v1271, 0.0
  %v2438 = vmax.f32 %v1276, 0.0
  %v2439 = vmax.f32 %v1281, 0.0
  %v2440 = vmax.f32 %v1286, 0.0
  %v2441 = vmax.f32 %v1291, 0.0
  %v2442 = vmax.f32 %v1296, 0.0
  %v2443 = vmax.f32 %v1301, 0.0
  %v2444 = vmax.f32 %v1306, 0.0
  %v2445 = vmax.f32 %v1311, 0.0
  %v2446 = vmax.f32 %v1316, 0.0
  %v2447 = vmax.f32 %v1321, 0.0
  %v2448 = vmax.f32 %v1326, 0.0
  %v2449 = vmax.f32 %v1331, 0.0
  %v2450 = vmax.f32 %v1336, 0.0
  %v2451 = vmax.f32 %v1341, 0.0
  %v2452 = vmax.f32 %v1346, 0.0
  %v2453 = vmax.f32 %v1351, 0.0
  %v2454 = vmax.f32 %v1356, 0.0
  %v2455 = vmax.f32 %v1361, 0.0
  %v2456 = vmax.f32 %v1366, 0.0
  %v2457 = vmax.f32 %v1371, 0.0
  %v2458 = vmax.f32 %v1376, 0.0
  %v2459 = vmax.f32 %v1381, 0.0
  %v2460 = vmax.f32 %v1386, 0.0
  %v2461 = vmax.f32 %v1391, 0.0
  %v2462 = vmax.f32 %v1396, 0.0
  %v2463 = vmax.f32 %v1401, 0.0
  %v2464 = vmax.f32 %v1406, 0.0
  %v2465 = vmax.f32 %v1411, 0.0
  %v2466 = vmax.f32 %v1416, 0.0
  %v2467 = vmax.f32 %v1421, 0.0
  %v2468 = vmax.f32 %v1426, 0.0
  %v2469 = vmax.f32 %v1431, 0.0
  %v2470 = vmax.f32 %v1436, 0.0
  %v2471 = vmax.f32 %v1441, 0.0
  %v2472 = vmax.f32 %v1446, 0.0
  %v2473 = vmax.f32 %v1451, 0.0
  %v2474 = vmax.f32 %v1456, 0.0
  %v2475 = vmax.f32 %v1461, 0.0
  %v2476 = vmax.f32 %v1466, 0.0
  %v2477 = vmax.f32 %v1471, 0.0
  %v2478 = vmax.f32 %v1476, 0.0
  %v2479 = vmax.f32 %v1481, 0.0
  %v2480 = vmax.f32 %v1486, 0.0
  %v2481 = vmax.f32 %v1491, 0.0
  %v2482 = vmax.f32 %v1496, 0.0
  %v2483 = vmax.f32 %v1501, 0.0
  %v2484 = vmax.f32 %v1506, 0.0
  %v2485 = vmax.f32 %v1511, 0.0
  %v2486 = vmax.f32 %v1516, 0.0
  %v2487 = vmax.f32 %v1521, 0.0
  %v2488 = vmax.f32 %v1526, 0.0
  %v2489 = vmax.f32 %v1531, 0.0
  %v2490 = vmax.f32 %v1536, 0.0
  %v2491 = vmax.f32 %v1541, 0.0
  %v2492 = vmax.f32 %v1546, 0.0
  %v2493 = vmax.f32 %v1551, 0.0
  %v2494 = vmax.f32 %v1556, 0.0
  %v2495 = vmax.f32 %v1561, 0.0
  %v2496 = vmax.f32 %v1566, 0.0
  %v2497 = vmax.f32 %v1571, 0.0
  %v2498 = vmax.f32 %v1576, 0.0
  %v2499 = vmax.f32 %v1581, 0.0
  %v2500 = vmax.f32 %v1586, 0.0
  %v2501 = vmax.f32 %v1591, 0.0
  %v2502 = vmax.f32 %v1596, 0.0
  %v2503 = vmax.f32 %v1601, 0.0
  %v2504 = vmax.f32 %v1606, 0.0
  %v2505 = vmax.f32 %v1611, 0.0
  %v2506 = vmax.f32 %v1616, 0.0
  %v2507 = vmax.f32 %v1621, 0.0
  %v2508 = vmax.f32 %v1626, 0.0
  %v2509 = vmax.f32 %v1631, 0.0
  %v2510 = vmax.f32 %v1636, 0.0
  %v2511 = vmax.f32 %v1641, 0.0
  %v2512 = vmax.f32 %v1646, 0.0
  %v2513 = vmax.f32 %v1651, 0.0
  %v2514 = vmax.f32 %v1656, 0.0
  %v2515 = vmax.f32 %v1661, 0.0
  %v2516 = vmax.f32 %v1666, 0.0
  %v2517 = vmax.f32 %v1671, 0.0
  %v2518 = vmax.f32 %v1676, 0.0
  %v2519 = vmax.f32 %v1681, 0.0
  %v2520 = vmax.f32 %v1686, 0.0
  %v2521 = vmax.f32 %v1691, 0.0
  %v2522 = vmax.f32 %v1696, 0.0
  %v2523 = vmax.f32 %v1701, 0.0
  %v2524 = vmax.f32 %v1706, 0.0
  %v2525 = vmax.f32 %v1711, 0.0
  %v2526 = vmax.f32 %v1716, 0.0
  %v2527 = vmax.f32 %v1721, 0.0
  %v2528 = vmax.f32 %v1726, 0.0
  %v2529 = vmax.f32 %v1731, 0.0
  %v2530 = vmax.f32 %v1736, 0.0
  %v2531 = vmax.f32 %v1741, 0.0
  %v2532 = vmax.f32 %v1746, 0.0
  %v2533 = vmax.f32 %v1751, 0.0
  %v2534 = vmax.f32 %v1756, 0.0
  %v2535 = vmax.f32 %v1761, 0.0
  %v2536 = vmax.f32 %v1766, 0.0
  %v2537 = vmax.f32 %v1771, 0.0
  %v2538 = vmax.f32 %v1776, 0.0
  %v2539 = vmax.f32 %v1781, 0.0
  %v2540 = vmax.f32 %v1786, 0.0
  %v2541 = vmax.f32 %v1791, 0.0
  %v2542 = vmax.f32 %v1796, 0.0
  %v2543 = vmax.f32 %v1801, 0.0
  %v2544 = vmax.f32 %v1806, 0.0
  %v2545 = vmax.f32 %v1811, 0.0
  %v2546 = vmax.f32 %v1816, 0.0
  %v2547 = vmax.f32 %v1821, 0.0
  %v2548 = vmax.f32 %v1826, 0.0
  %v2549 = vmax.f32 %v1831, 0.0
  %v2550 = vmax.f32 %v1836, 0.0
  %v2551 = vmax.f32 %v1841, 0.0
  %v2552 = vmax.f32 %v1846, 0.0
  %v2553 = vmax.f32 %v1851, 0.0
  %v2554 = vmax.f32 %v1856, 0.0
  %v2555 = vmax.f32 %v1861, 0.0
  %v2556 = vmax.f32 %v1866, 0.0
  %v2557 = vmax.f32 %v1871, 0.0
  %v2558 = vmax.f32 %v1876, 0.0
  %v2559 = vmax.f32 %v1881, 0.0
  %v2560 = vmax.f32 %v1886, 0.0
  %v2561 = vmax.f32 %v1891, 0.0
  %v2562 = vmax.f32 %v1896, 0.0
  %v2563 = vmax.f32 %v1901, 0.0
  %v2564 = vmax.f32 %v1906, 0.0
  %v2565 = vmax.f32 %v1911, 0.0
  %v2566 = vmax.f32 %v1916, 0.0
  %v2567 = vmax.f32 %v1921, 0.0
  %v2568 = vmax.f32 %v1926, 0.0
  %v2569 = vmax.f32 %v1931, 0.0
  %v2570 = vmax.f32 %v1936, 0.0
  %v2571 = vmax.f32 %v1941, 0.0
  %v2572 = vmax.f32 %v1946, 0.0
  %v2573 = vmax.f32 %v1951, 0.0
  %v2574 = vmax.f32 %v1956, 0.0
  %v2575 = vmax.f32 %v1961, 0.0
  %v2576 = vmax.f32 %v1966, 0.0
  %v2577 = vmax.f32 %v1971, 0.0
  %v2578 = vmax.f32 %v1976, 0.0
  %v2579 = vmax.f32 %v1981, 0.0
  %v2580 = vmax.f32 %v1986, 0.0
  %v2581 = vmax.f32 %v1991, 0.0
  %v2582 = vmax.f32 %v1996, 0.0
  %v2583 = vmax.f32 %v2001, 0.0
  %v2584 = vmax.f32 %v2006, 0.0
  %v2585 = vmax.f32 %v2011, 0.0
  %v2586 = vmax.f32 %v2016, 0.0
  %v2587 = vmax.f32 %v2021, 0.0
  %v2588 = vmax.f32 %v2026, 0.0
  %v2589 = vmax.f32 %v2031, 0.0
  %v2590 = vmax.f32 %v2036, 0.0
  %v2591 = vmax.f32 %v2041, 0.0
  %v2592 = vmax.f32 %v2046, 0.0
  %v2593 = vmax.f32 %v2051, 0.0
  %v2594 = vmax.f32 %v2056, 0.0
  %v2595 = vmax.f32 %v2061, 0.0
  %v2596 = vmax.f32 %v2066, 0.0
  %v2597 = vmax.f32 %v2071, 0.0
  %v2598 = vmax.f32 %v2076, 0.0
  %v2599 = vmax.f32 %v2081, 0.0
  %v2600 = vmax.f32 %v2086, 0.0
  %v2601 = vmax.f32 %v2091, 0.0
  %v2602 = vmax.f32 %v2096, 0.0
  %v2603 = vmax.f32 %v2101, 0.0
  %v2604 = vmax.f32 %v2106, 0.0
  %v2605 = vmax.f32 %v2111, 0.0
  %v2606 = vmax.f32 %v2116, 0.0
  %v2607 = vmax.f32 %v2121, 0.0
  %v2608 = vmax.f32 %v2126, 0.0
  %v2609 = vmax.f32 %v2131, 0.0
  %v2610 = vmax.f32 %v2136, 0.0
  %v2611 = vmax.f32 %v2141, 0.0
  %v2612 = vmax.f32 %v2146, 0.0
  %v2613 = vmax.f32 %v2151, 0.0
  %v2614 = vmax.f32 %v2156, 0.0
  %v2615 = vmax.f32 %v2161, 0.0
  %v2616 = vmax.f32 %v2166, 0.0
  %v2617 = vmax.f32 %v2171, 0.0
  %v2618 = vmax.f32 %v2176, 0.0
  %v2619 = vmax.f32 %v2181, 0.0
  %v2620 = vmax.f32 %v2186, 0.0
  %v2621 = vmax.f32 %v2191, 0.0
  %v2622 = vmax.f32 %v2196, 0.0
  %v2623 = vmax.f32 %v2201, 0.0
  %v2624 = vmax.f32 %v2206, 0.0
  %v2625 = vmax.f32 %v2211, 0.0
  %v2626 = vmax.f32 %v2216, 0.0
  %v2627 = vmax.f32 %v2221, 0.0
  %v2628 = vmax.f32 %v2226, 0.0
  %v2629 = vmax.f32 %v2231, 0.0
  %v2630 = vmax.f32 %v2236, 0.0
  %v2631 = vmax.f32 %v2241, 0.0
  %v2632 = vmax.f32 %v2246, 0.0
  %v2633 = vmax.f32 %v2251, 0.0
  %v2634 = vmax.f32 %v2256, 0.0
  %v2635 = vmax.f32 %v2261, 0.0
  %v2636 = vmax.f32 %v2266, 0.0
  %v2637 = vmax.f32 %v2271, 0.0
  %v2638 = vmax.f32 %v2276, 0.0
  %v2639 = vmax.f32 %v2281, 0.0
  %v2640 = vmax.f32 %v2286, 0.0
  %v2641 = vmax.f32 %v2291, 0.0
  %v2642 = vmax.f32 %v2296, 0.0
  %v2643 = vmax.f32 %v2301, 0.0
  %v2644 = vmax.f32 %v2306, 0.0
  %v2645 = vmax.f32 %v2311, 0.0
  %v2646 = vmax.f32 %v2316, 0.0
  %v2647 = vmax.f32 %v2321, 0.0
  %v2648 = vmax.f32 %v2326, 0.0
  %v2649 = vmax.f32 %v2331, 0.0
  %v2650 = vmax.f32 %v2336, 0.0
  %v2651 = vmax.f32 %v2341, 0.0
  %v2652 = vmax.f32 %v2346, 0.0
  %v2653 = vmax.f32 %v2351, 0.0
  %v2654 = vmax.f32 %v2356, 0.0
  %v2655 = vmax.f32 %v2361, 0.0
  %v2656 = vmax.f32 %v2366, 0.0
  %v2657 = vmax.f32 %v2371, 0.0
  %v2658 = vmax.f32 %v2376, 0.0
  %v2659 = vmax.f32 %v2381, 0.0
  %v2660 = vmax.f32 %v2386, 0.0
  %v2661 = vmax.f32 %v2391, 0.0
  %v2662 = vmax.f32 %v2396, 0.0
  %v2663 = vmax.f32 %v2401, 0.0
  %v2664 = vmax.f32 %v2406, 0.0
  %v2665 = vld [vmem:[%s3] sm:$0xff]
  %v2666 = vld [vmem:[%s3 + $0x8] sm:$0xff]
  %v2667 = vld [vmem:[%s3 + $0x10] sm:$0xff]
  %v2668 = vld [vmem:[%s3 + $0x18] sm:$0xff]
  %v2669 = vld [vmem:[%s3 + $0x20] sm:$0xff]
  %v2670 = vld [vmem:[%s3 + $0x28] sm:$0xff]
  %v2671 = vld [vmem:[%s3 + $0x30] sm:$0xff]
  %v2672 = vld [vmem:[%s3 + $0x38] sm:$0xff]
  %v2673 = vld [vmem:[%s3 + $0x40] sm:$0xff]
  %v2674 = vld [vmem:[%s3 + $0x48] sm:$0xff]
  %v2675 = vld [vmem:[%s3 + $0x50] sm:$0xff]
  %v2676 = vld [vmem:[%s3 + $0x58] sm:$0xff]
  %v2677 = vld [vmem:[%s3 + $0x60] sm:$0xff]
  %v2678 = vld [vmem:[%s3 + $0x68] sm:$0xff]
  %v2679 = vld [vmem:[%s3 + $0x70] sm:$0xff]
  %v2680 = vld [vmem:[%s3 + $0x78] sm:$0xff]
  %2681 = vmatprep.subr.mxu0 0.0
  %2682 = vmatpush1.msra.mxu0 %v2409
  %2683 = vmatprep.subr.mxu0 0.0
  %2684 = vmatpush1.msra.mxu0 %v2410
  %2685 = vmatprep.subr.mxu0 0.0
  %2686 = vmatpush1.msra.mxu0 %v2411
  %2687 = vmatprep.subr.mxu0 0.0
  %2688 = vmatpush1.msra.mxu0 %v2412
  %2689 = vmatprep.subr.mxu0 0.0
  %2690 = vmatpush1.msra.mxu0 %v2413
  %2691 = vmatprep.subr.mxu0 0.0
  %2692 = vmatpush1.msra.mxu0 %v2414
  %2693 = vmatprep.subr.mxu0 0.0
  %2694 = vmatpush1.msra.mxu0 %v2415
  %2695 = vmatprep.subr.mxu0 0.0
  %2696 = vmatpush1.msra.mxu0 %v2416
  %2697 = vmatprep.subr.mxu0 0.0
  %2698 = vmatpush1.msra.mxu0 %v2417
  %2699 = vmatprep.subr.mxu0 0.0
  %2700 = vmatpush1.msra.mxu0 %v2418
  %2701 = vmatprep.subr.mxu0 0.0
  %2702 = vmatpush1.msra.mxu0 %v2419
  %2703 = vmatprep.subr.mxu0 0.0
  %2704 = vmatpush1.msra.mxu0 %v2420
  %2705 = vmatprep.subr.mxu0 0.0
  %2706 = vmatpush1.msra.mxu0 %v2421
  %2707 = vmatprep.subr.mxu0 0.0
  %2708 = vmatpush1.msra.mxu0 %v2422
  %2709 = vmatprep.subr.mxu0 0.0
  %2710 = vmatpush1.msra.mxu0 %v2423
  %2711 = vmatprep.subr.mxu0 0.0
  %2712 = vmatpush1.msra.mxu0 %v2424
  %2713 = vmatprep.subr.mxu0 0.0
  %2714 = vmatpush1.msra.mxu0 %v2425
  %2715 = vmatprep.subr.mxu0 0.0
  %2716 = vmatpush1.msra.mxu0 %v2426
  %2717 = vmatprep.subr.mxu0 0.0
  %2718 = vmatpush1.msra.mxu0 %v2427
  %2719 = vmatprep.subr.mxu0 0.0
  %2720 = vmatpush1.msra.mxu0 %v2428
  %2721 = vmatprep.subr.mxu0 0.0
  %2722 = vmatpush1.msra.mxu0 %v2429
  %2723 = vmatprep.subr.mxu0 0.0
  %2724 = vmatpush1.msra.mxu0 %v2430
  %2725 = vmatprep.subr.mxu0 0.0
  %2726 = vmatpush1.msra.mxu0 %v2431
  %2727 = vmatprep.subr.mxu0 0.0
  %2728 = vmatpush1.msra.mxu0 %v2432
  %2729 = vmatprep.subr.mxu0 0.0
  %2730 = vmatpush1.msra.mxu0 %v2433
  %2731 = vmatprep.subr.mxu0 0.0
  %2732 = vmatpush1.msra.mxu0 %v2434
  %2733 = vmatprep.subr.mxu0 0.0
  %2734 = vmatpush1.msra.mxu0 %v2435
  %2735 = vmatprep.subr.mxu0 0.0
  %2736 = vmatpush1.msra.mxu0 %v2436
  %2737 = vmatprep.subr.mxu0 0.0
  %2738 = vmatpush1.msra.mxu0 %v2437
  %2739 = vmatprep.subr.mxu0 0.0
  %2740 = vmatpush1.msra.mxu0 %v2438
  %2741 = vmatprep.subr.mxu0 0.0
  %2742 = vmatpush1.msra.mxu0 %v2439
  %2743 = vmatprep.subr.mxu0 0.0
  %2744 = vmatpush1.msra.mxu0 %v2440
  %2745 = vmatprep.mubr.f32.mxu0 %v2666
  %2746 = vmatmul.mubr.f32.gmra.mrb[0].mxu0 %v2665
  %v2747 = vpop.f32.mrb[0].mxu0
  %v2748 = vadd.f32 0.0, %v2747
  %v2749 = vpop.f32.mrb[0].mxu0
  %2750 = vdwg.mxu0
  %2751 = vmatprep.subr.mxu0 0.0
  %2752 = vmatpush1.msra.mxu0 %v2441
  %2753 = vmatprep.subr.mxu0 0.0
  %2754 = vmatpush1.msra.mxu0 %v2442
  %2755 = vmatprep.subr.mxu0 0.0
  %2756 = vmatpush1.msra.mxu0 %v2443
  %2757 = vmatprep.subr.mxu0 0.0
  %2758 = vmatpush1.msra.mxu0 %v2444
  %2759 = vmatprep.subr.mxu0 0.0
  %2760 = vmatpush1.msra.mxu0 %v2445
  %2761 = vmatprep.subr.mxu0 0.0
  %2762 = vmatpush1.msra.mxu0 %v2446
  %2763 = vmatprep.subr.mxu0 0.0
  %2764 = vmatpush1.msra.mxu0 %v2447
  %2765 = vmatprep.subr.mxu0 0.0
  %2766 = vmatpush1.msra.mxu0 %v2448
  %2767 = vmatprep.subr.mxu0 0.0
  %2768 = vmatpush1.msra.mxu0 %v2449
  %2769 = vmatprep.subr.mxu0 0.0
  %2770 = vmatpush1.msra.mxu0 %v2450
  %2771 = vmatprep.subr.mxu0 0.0
  %2772 = vmatpush1.msra.mxu0 %v2451
  %2773 = vmatprep.subr.mxu0 0.0
  %2774 = vmatpush1.msra.mxu0 %v2452
  %2775 = vmatprep.subr.mxu0 0.0
  %2776 = vmatpush1.msra.mxu0 %v2453
  %2777 = vmatprep.subr.mxu0 0.0
  %2778 = vmatpush1.msra.mxu0 %v2454
  %2779 = vmatprep.subr.mxu0 0.0
  %2780 = vmatpush1.msra.mxu0 %v2455
  %2781 = vmatprep.subr.mxu0 0.0
  %2782 = vmatpush1.msra.mxu0 %v2456
  %2783 = vmatprep.subr.mxu0 0.0
  %2784 = vmatpush1.msra.mxu0 %v2457
  %2785 = vmatprep.subr.mxu0 0.0
  %2786 = vmatpush1.msra.mxu0 %v2458
  %2787 = vmatprep.subr.mxu0 0.0
  %2788 = vmatpush1.msra.mxu0 %v2459
  %2789 = vmatprep.subr.mxu0 0.0
  %2790 = vmatpush1.msra.mxu0 %v2460
  %2791 = vmatprep.subr.mxu0 0.0
  %2792 = vmatpush1.msra.mxu0 %v2461
  %2793 = vmatprep.subr.mxu0 0.0
  %2794 = vmatpush1.msra.mxu0 %v2462
  %2795 = vmatprep.subr.mxu0 0.0
  %2796 = vmatpush1.msra.mxu0 %v2463
  %2797 = vmatprep.subr.mxu0 0.0
  %2798 = vmatpush1.msra.mxu0 %v2464
  %2799 = vmatprep.subr.mxu0 0.0
  %2800 = vmatpush1.msra.mxu0 %v2465
  %2801 = vmatprep.subr.mxu0 0.0
  %2802 = vmatpush1.msra.mxu0 %v2466
  %2803 = vmatprep.subr.mxu0 0.0
  %2804 = vmatpush1.msra.mxu0 %v2467
  %2805 = vmatprep.subr.mxu0 0.0
  %2806 = vmatpush1.msra.mxu0 %v2468
  %2807 = vmatprep.subr.mxu0 0.0
  %2808 = vmatpush1.msra.mxu0 %v2469
  %2809 = vmatprep.subr.mxu0 0.0
  %2810 = vmatpush1.msra.mxu0 %v2470
  %2811 = vmatprep.subr.mxu0 0.0
  %2812 = vmatpush1.msra.mxu0 %v2471
  %2813 = vmatprep.subr.mxu0 0.0
  %2814 = vmatpush1.msra.mxu0 %v2472
  %2815 = vmatprep.mubr.f32.mxu0 %v2668
  %2816 = vmatmul.mubr.f32.gmra.mrb[0].mxu0 %v2667
  %v2817 = vpop.f32.mrb[0].mxu0
  %v2818 = vadd.f32 %v2748, %v2817
  %v2819 = vpop.f32.mrb[0].mxu0
  %2820 = vdwg.mxu0
  %2821 = vmatprep.subr.mxu0 0.0
  %2822 = vmatpush1.msra.mxu0 %v2473
  %2823 = vmatprep.subr.mxu0 0.0
  %2824 = vmatpush1.msra.mxu0 %v2474
  %2825 = vmatprep.subr.mxu0 0.0
  %2826 = vmatpush1.msra.mxu0 %v2475
  %2827 = vmatprep.subr.mxu0 0.0
  %2828 = vmatpush1.msra.mxu0 %v2476
  %2829 = vmatprep.subr.mxu0 0.0
  %2830 = vmatpush1.msra.mxu0 %v2477
  %2831 = vmatprep.subr.mxu0 0.0
  %2832 = vmatpush1.msra.mxu0 %v2478
  %2833 = vmatprep.subr.mxu0 0.0
  %2834 = vmatpush1.msra.mxu0 %v2479
  %2835 = vmatprep.subr.mxu0 0.0
  %2836 = vmatpush1.msra.mxu0 %v2480
  %2837 = vmatprep.subr.mxu0 0.0
  %2838 = vmatpush1.msra.mxu0 %v2481
  %2839 = vmatprep.subr.mxu0 0.0
  %2840 = vmatpush1.msra.mxu0 %v2482
  %2841 = vmatprep.subr.mxu0 0.0
  %2842 = vmatpush1.msra.mxu0 %v2483
  %2843 = vmatprep.subr.mxu0 0.0
  %2844 = vmatpush1.msra.mxu0 %v2484
  %2845 = vmatprep.subr.mxu0 0.0
  %2846 = vmatpush1.msra.mxu0 %v2485
  %2847 = vmatprep.subr.mxu0 0.0
  %2848 = vmatpush1.msra.mxu0 %v2486
  %2849 = vmatprep.subr.mxu0 0.0
  %2850 = vmatpush1.msra.mxu0 %v2487
  %2851 = vmatprep.subr.mxu0 0.0
  %2852 = vmatpush1.msra.mxu0 %v2488
  %2853 = vmatprep.subr.mxu0 0.0
  %2854 = vmatpush1.msra.mxu0 %v2489
  %2855 = vmatprep.subr.mxu0 0.0
  %2856 = vmatpush1.msra.mxu0 %v2490
  %2857 = vmatprep.subr.mxu0 0.0
  %2858 = vmatpush1.msra.mxu0 %v2491
  %2859 = vmatprep.subr.mxu0 0.0
  %2860 = vmatpush1.msra.mxu0 %v2492
  %2861 = vmatprep.subr.mxu0 0.0
  %2862 = vmatpush1.msra.mxu0 %v2493
  %2863 = vmatprep.subr.mxu0 0.0
  %2864 = vmatpush1.msra.mxu0 %v2494
  %2865 = vmatprep.subr.mxu0 0.0
  %2866 = vmatpush1.msra.mxu0 %v2495
  %2867 = vmatprep.subr.mxu0 0.0
  %2868 = vmatpush1.msra.mxu0 %v2496
  %2869 = vmatprep.subr.mxu0 0.0
  %2870 = vmatpush1.msra.mxu0 %v2497
  %2871 = vmatprep.subr.mxu0 0.0
  %2872 = vmatpush1.msra.mxu0 %v2498
  %2873 = vmatprep.subr.mxu0 0.0
  %2874 = vmatpush1.msra.mxu0 %v2499
  %2875 = vmatprep.subr.mxu0 0.0
  %2876 = vmatpush1.msra.mxu0 %v2500
  %2877 = vmatprep.subr.mxu0 0.0
  %2878 = vmatpush1.msra.mxu0 %v2501
  %2879 = vmatprep.subr.mxu0 0.0
  %2880 = vmatpush1.msra.mxu0 %v2502
  %2881 = vmatprep.subr.mxu0 0.0
  %2882 = vmatpush1.msra.mxu0 %v2503
  %2883 = vmatprep.subr.mxu0 0.0
  %2884 = vmatpush1.msra.mxu0 %v2504
  %2885 = vmatprep.mubr.f32.mxu0 %v2670
  %2886 = vmatmul.mubr.f32.gmra.mrb[0].mxu0 %v2669
  %v2887 = vpop.f32.mrb[0].mxu0
  %v2888 = vadd.f32 %v2818, %v2887
  %v2889 = vpop.f32.mrb[0].mxu0
  %2890 = vdwg.mxu0
  %2891 = vmatprep.subr.mxu0 0.0
  %2892 = vmatpush1.msra.mxu0 %v2505
  %2893 = vmatprep.subr.mxu0 0.0
  %2894 = vmatpush1.msra.mxu0 %v2506
  %2895 = vmatprep.subr.mxu0 0.0
  %2896 = vmatpush1.msra.mxu0 %v2507
  %2897 = vmatprep.subr.mxu0 0.0
  %2898 = vmatpush1.msra.mxu0 %v2508
  %2899 = vmatprep.subr.mxu0 0.0
  %2900 = vmatpush1.msra.mxu0 %v2509
  %2901 = vmatprep.subr.mxu0 0.0
  %2902 = vmatpush1.msra.mxu0 %v2510
  %2903 = vmatprep.subr.mxu0 0.0
  %2904 = vmatpush1.msra.mxu0 %v2511
  %2905 = vmatprep.subr.mxu0 0.0
  %2906 = vmatpush1.msra.mxu0 %v2512
  %2907 = vmatprep.subr.mxu0 0.0
  %2908 = vmatpush1.msra.mxu0 %v2513
  %2909 = vmatprep.subr.mxu0 0.0
  %2910 = vmatpush1.msra.mxu0 %v2514
  %2911 = vmatprep.subr.mxu0 0.0
  %2912 = vmatpush1.msra.mxu0 %v2515
  %2913 = vmatprep.subr.mxu0 0.0
  %2914 = vmatpush1.msra.mxu0 %v2516
  %2915 = vmatprep.subr.mxu0 0.0
  %2916 = vmatpush1.msra.mxu0 %v2517
  %2917 = vmatprep.subr.mxu0 0.0
  %2918 = vmatpush1.msra.mxu0 %v2518
  %2919 = vmatprep.subr.mxu0 0.0
  %2920 = vmatpush1.msra.mxu0 %v2519
  %2921 = vmatprep.subr.mxu0 0.0
  %2922 = vmatpush1.msra.mxu0 %v2520
  %2923 = vmatprep.subr.mxu0 0.0
  %2924 = vmatpush1.msra.mxu0 %v2521
  %2925 = vmatprep.subr.mxu0 0.0
  %2926 = vmatpush1.msra.mxu0 %v2522
  %2927 = vmatprep.subr.mxu0 0.0
  %2928 = vmatpush1.msra.mxu0 %v2523
  %2929 = vmatprep.subr.mxu0 0.0
  %2930 = vmatpush1.msra.mxu0 %v2524
  %2931 = vmatprep.subr.mxu0 0.0
  %2932 = vmatpush1.msra.mxu0 %v2525
  %2933 = vmatprep.subr.mxu0 0.0
  %2934 = vmatpush1.msra.mxu0 %v2526
  %2935 = vmatprep.subr.mxu0 0.0
  %2936 = vmatpush1.msra.mxu0 %v2527
  %2937 = vmatprep.subr.mxu0 0.0
  %2938 = vmatpush1.msra.mxu0 %v2528
  %2939 = vmatprep.subr.mxu0 0.0
  %2940 = vmatpush1.msra.mxu0 %v2529
  %2941 = vmatprep.subr.mxu0 0.0
  %2942 = vmatpush1.msra.mxu0 %v2530
  %2943 = vmatprep.subr.mxu0 0.0
  %2944 = vmatpush1.msra.mxu0 %v2531
  %2945 = vmatprep.subr.mxu0 0.0
  %2946 = vmatpush1.msra.mxu0 %v2532
  %2947 = vmatprep.subr.mxu0 0.0
  %2948 = vmatpush1.msra.mxu0 %v2533
  %2949 = vmatprep.subr.mxu0 0.0
  %2950 = vmatpush1.msra.mxu0 %v2534
  %2951 = vmatprep.subr.mxu0 0.0
  %2952 = vmatpush1.msra.mxu0 %v2535
  %2953 = vmatprep.subr.mxu0 0.0
  %2954 = vmatpush1.msra.mxu0 %v2536
  %2955 = vmatprep.mubr.f32.mxu0 %v2672
  %2956 = vmatmul.mubr.f32.gmra.mrb[0].mxu0 %v2671
  %v2957 = vpop.f32.mrb[0].mxu0
  %v2958 = vadd.f32 %v2888, %v2957
  %v2959 = vpop.f32.mrb[0].mxu0
  %2960 = vdwg.mxu0
  %2961 = vmatprep.subr.mxu0 0.0
  %2962 = vmatpush1.msra.mxu0 %v2537
  %2963 = vmatprep.subr.mxu0 0.0
  %2964 = vmatpush1.msra.mxu0 %v2538
  %2965 = vmatprep.subr.mxu0 0.0
  %2966 = vmatpush1.msra.mxu0 %v2539
  %2967 = vmatprep.subr.mxu0 0.0
  %2968 = vmatpush1.msra.mxu0 %v2540
  %2969 = vmatprep.subr.mxu0 0.0
  %2970 = vmatpush1.msra.mxu0 %v2541
  %2971 = vmatprep.subr.mxu0 0.0
  %2972 = vmatpush1.msra.mxu0 %v2542
  %2973 = vmatprep.subr.mxu0 0.0
  %2974 = vmatpush1.msra.mxu0 %v2543
  %2975 = vmatprep.subr.mxu0 0.0
  %2976 = vmatpush1.msra.mxu0 %v2544
  %2977 = vmatprep.subr.mxu0 0.0
  %2978 = vmatpush1.msra.mxu0 %v2545
  %2979 = vmatprep.subr.mxu0 0.0
  %2980 = vmatpush1.msra.mxu0 %v2546
  %2981 = vmatprep.subr.mxu0 0.0
  %2982 = vmatpush1.msra.mxu0 %v2547
  %2983 = vmatprep.subr.mxu0 0.0
  %2984 = vmatpush1.msra.mxu0 %v2548
  %2985 = vmatprep.subr.mxu0 0.0
  %2986 = vmatpush1.msra.mxu0 %v2549
  %2987 = vmatprep.subr.mxu0 0.0
  %2988 = vmatpush1.msra.mxu0 %v2550
  %2989 = vmatprep.subr.mxu0 0.0
  %2990 = vmatpush1.msra.mxu0 %v2551
  %2991 = vmatprep.subr.mxu0 0.0
  %2992 = vmatpush1.msra.mxu0 %v2552
  %2993 = vmatprep.subr.mxu0 0.0
  %2994 = vmatpush1.msra.mxu0 %v2553
  %2995 = vmatprep.subr.mxu0 0.0
  %2996 = vmatpush1.msra.mxu0 %v2554
  %2997 = vmatprep.subr.mxu0 0.0
  %2998 = vmatpush1.msra.mxu0 %v2555
  %2999 = vmatprep.subr.mxu0 0.0
  %3000 = vmatpush1.msra.mxu0 %v2556
  %3001 = vmatprep.subr.mxu0 0.0
  %3002 = vmatpush1.msra.mxu0 %v2557
  %3003 = vmatprep.subr.mxu0 0.0
  %3004 = vmatpush1.msra.mxu0 %v2558
  %3005 = vmatprep.subr.mxu0 0.0
  %3006 = vmatpush1.msra.mxu0 %v2559
  %3007 = vmatprep.subr.mxu0 0.0
  %3008 = vmatpush1.msra.mxu0 %v2560
  %3009 = vmatprep.subr.mxu0 0.0
  %3010 = vmatpush1.msra.mxu0 %v2561
  %3011 = vmatprep.subr.mxu0 0.0
  %3012 = vmatpush1.msra.mxu0 %v2562
  %3013 = vmatprep.subr.mxu0 0.0
  %3014 = vmatpush1.msra.mxu0 %v2563
  %3015 = vmatprep.subr.mxu0 0.0
  %3016 = vmatpush1.msra.mxu0 %v2564
  %3017 = vmatprep.subr.mxu0 0.0
  %3018 = vmatpush1.msra.mxu0 %v2565
  %3019 = vmatprep.subr.mxu0 0.0
  %3020 = vmatpush1.msra.mxu0 %v2566
  %3021 = vmatprep.subr.mxu0 0.0
  %3022 = vmatpush1.msra.mxu0 %v2567
  %3023 = vmatprep.subr.mxu0 0.0
  %3024 = vmatpush1.msra.mxu0 %v2568
  %3025 = vmatprep.mubr.f32.mxu0 %v2674
  %3026 = vmatmul.mubr.f32.gmra.mrb[0].mxu0 %v2673
  %v3027 = vpop.f32.mrb[0].mxu0
  %v3028 = vadd.f32 %v2958, %v3027
  %v3029 = vpop.f32.mrb[0].mxu0
  %3030 = vdwg.mxu0
  %3031 = vmatprep.subr.mxu0 0.0
  %3032 = vmatpush1.msra.mxu0 %v2569
  %3033 = vmatprep.subr.mxu0 0.0
  %3034 = vmatpush1.msra.mxu0 %v2570
  %3035 = vmatprep.subr.mxu0 0.0
  %3036 = vmatpush1.msra.mxu0 %v2571
  %3037 = vmatprep.subr.mxu0 0.0
  %3038 = vmatpush1.msra.mxu0 %v2572
  %3039 = vmatprep.subr.mxu0 0.0
  %3040 = vmatpush1.msra.mxu0 %v2573
  %3041 = vmatprep.subr.mxu0 0.0
  %3042 = vmatpush1.msra.mxu0 %v2574
  %3043 = vmatprep.subr.mxu0 0.0
  %3044 = vmatpush1.msra.mxu0 %v2575
  %3045 = vmatprep.subr.mxu0 0.0
  %3046 = vmatpush1.msra.mxu0 %v2576
  %3047 = vmatprep.subr.mxu0 0.0
  %3048 = vmatpush1.msra.mxu0 %v2577
  %3049 = vmatprep.subr.mxu0 0.0
  %3050 = vmatpush1.msra.mxu0 %v2578
  %3051 = vmatprep.subr.mxu0 0.0
  %3052 = vmatpush1.msra.mxu0 %v2579
  %3053 = vmatprep.subr.mxu0 0.0
  %3054 = vmatpush1.msra.mxu0 %v2580
  %3055 = vmatprep.subr.mxu0 0.0
  %3056 = vmatpush1.msra.mxu0 %v2581
  %3057 = vmatprep.subr.mxu0 0.0
  %3058 = vmatpush1.msra.mxu0 %v2582
  %3059 = vmatprep.subr.mxu0 0.0
  %3060 = vmatpush1.msra.mxu0 %v2583
  %3061 = vmatprep.subr.mxu0 0.0
  %3062 = vmatpush1.msra.mxu0 %v2584
  %3063 = vmatprep.subr.mxu0 0.0
  %3064 = vmatpush1.msra.mxu0 %v2585
  %3065 = vmatprep.subr.mxu0 0.0
  %3066 = vmatpush1.msra.mxu0 %v2586
  %3067 = vmatprep.subr.mxu0 0.0
  %3068 = vmatpush1.msra.mxu0 %v2587
  %3069 = vmatprep.subr.mxu0 0.0
  %3070 = vmatpush1.msra.mxu0 %v2588
  %3071 = vmatprep.subr.mxu0 0.0
  %3072 = vmatpush1.msra.mxu0 %v2589
  %3073 = vmatprep.subr.mxu0 0.0
  %3074 = vmatpush1.msra.mxu0 %v2590
  %3075 = vmatprep.subr.mxu0 0.0
  %3076 = vmatpush1.msra.mxu0 %v2591
  %3077 = vmatprep.subr.mxu0 0.0
  %3078 = vmatpush1.msra.mxu0 %v2592
  %3079 = vmatprep.subr.mxu0 0.0
  %3080 = vmatpush1.msra.mxu0 %v2593
  %3081 = vmatprep.subr.mxu0 0.0
  %3082 = vmatpush1.msra.mxu0 %v2594
  %3083 = vmatprep.subr.mxu0 0.0
  %3084 = vmatpush1.msra.mxu0 %v2595
  %3085 = vmatprep.subr.mxu0 0.0
  %3086 = vmatpush1.msra.mxu0 %v2596
  %3087 = vmatprep.subr.mxu0 0.0
  %3088 = vmatpush1.msra.mxu0 %v2597
  %3089 = vmatprep.subr.mxu0 0.0
  %3090 = vmatpush1.msra.mxu0 %v2598
  %3091 = vmatprep.subr.mxu0 0.0
  %3092 = vmatpush1.msra.mxu0 %v2599
  %3093 = vmatprep.subr.mxu0 0.0
  %3094 = vmatpush1.msra.mxu0 %v2600
  %3095 = vmatprep.mubr.f32.mxu0 %v2676
  %3096 = vmatmul.mubr.f32.gmra.mrb[0].mxu0 %v2675
  %v3097 = vpop.f32.mrb[0].mxu0
  %v3098 = vadd.f32 %v3028, %v3097
  %v3099 = vpop.f32.mrb[0].mxu0
  %3100 = vdwg.mxu0
  %3101 = vmatprep.subr.mxu0 0.0
  %3102 = vmatpush1.msra.mxu0 %v2601
  %3103 = vmatprep.subr.mxu0 0.0
  %3104 = vmatpush1.msra.mxu0 %v2602
  %3105 = vmatprep.subr.mxu0 0.0
  %3106 = vmatpush1.msra.mxu0 %v2603
  %3107 = vmatprep.subr.mxu0 0.0
  %3108 = vmatpush1.msra.mxu0 %v2604
  %3109 = vmatprep.subr.mxu0 0.0
  %3110 = vmatpush1.msra.mxu0 %v2605
  %3111 = vmatprep.subr.mxu0 0.0
  %3112 = vmatpush1.msra.mxu0 %v2606
  %3113 = vmatprep.subr.mxu0 0.0
  %3114 = vmatpush1.msra.mxu0 %v2607
  %3115 = vmatprep.subr.mxu0 0.0
  %3116 = vmatpush1.msra.mxu0 %v2608
  %3117 = vmatprep.subr.mxu0 0.0
  %3118 = vmatpush1.msra.mxu0 %v2609
  %3119 = vmatprep.subr.mxu0 0.0
  %3120 = vmatpush1.msra.mxu0 %v2610
  %3121 = vmatprep.subr.mxu0 0.0
  %3122 = vmatpush1.msra.mxu0 %v2611
  %3123 = vmatprep.subr.mxu0 0.0
  %3124 = vmatpush1.msra.mxu0 %v2612
  %3125 = vmatprep.subr.mxu0 0.0
  %3126 = vmatpush1.msra.mxu0 %v2613
  %3127 = vmatprep.subr.mxu0 0.0
  %3128 = vmatpush1.msra.mxu0 %v2614
  %3129 = vmatprep.subr.mxu0 0.0
  %3130 = vmatpush1.msra.mxu0 %v2615
  %3131 = vmatprep.subr.mxu0 0.0
  %3132 = vmatpush1.msra.mxu0 %v2616
  %3133 = vmatprep.subr.mxu0 0.0
  %3134 = vmatpush1.msra.mxu0 %v2617
  %3135 = vmatprep.subr.mxu0 0.0
  %3136 = vmatpush1.msra.mxu0 %v2618
  %3137 = vmatprep.subr.mxu0 0.0
  %3138 = vmatpush1.msra.mxu0 %v2619
  %3139 = vmatprep.subr.mxu0 0.0
  %3140 = vmatpush1.msra.mxu0 %v2620
  %3141 = vmatprep.subr.mxu0 0.0
  %3142 = vmatpush1.msra.mxu0 %v2621
  %3143 = vmatprep.subr.mxu0 0.0
  %3144 = vmatpush1.msra.mxu0 %v2622
  %3145 = vmatprep.subr.mxu0 0.0
  %3146 = vmatpush1.msra.mxu0 %v2623
  %3147 = vmatprep.subr.mxu0 0.0
  %3148 = vmatpush1.msra.mxu0 %v2624
  %3149 = vmatprep.subr.mxu0 0.0
  %3150 = vmatpush1.msra.mxu0 %v2625
  %3151 = vmatprep.subr.mxu0 0.0
  %3152 = vmatpush1.msra.mxu0 %v2626
  %3153 = vmatprep.subr.mxu0 0.0
  %3154 = vmatpush1.msra.mxu0 %v2627
  %3155 = vmatprep.subr.mxu0 0.0
  %3156 = vmatpush1.msra.mxu0 %v2628
  %3157 = vmatprep.subr.mxu0 0.0
  %3158 = vmatpush1.msra.mxu0 %v2629
  %3159 = vmatprep.subr.mxu0 0.0
  %3160 = vmatpush1.msra.mxu0 %v2630
  %3161 = vmatprep.subr.mxu0 0.0
  %3162 = vmatpush1.msra.mxu0 %v2631
  %3163 = vmatprep.subr.mxu0 0.0
  %3164 = vmatpush1.msra.mxu0 %v2632
  %3165 = vmatprep.mubr.f32.mxu0 %v2678
  %3166 = vmatmul.mubr.f32.gmra.mrb[0].mxu0 %v2677
  %v3167 = vpop.f32.mrb[0].mxu0
  %v3168 = vadd.f32 %v3098, %v3167
  %v3169 = vpop.f32.mrb[0].mxu0
  %3170 = vdwg.mxu0
  %3171 = vmatprep.subr.mxu0 0.0
  %3172 = vmatpush1.msra.mxu0 %v2633
  %3173 = vmatprep.subr.mxu0 0.0
  %3174 = vmatpush1.msra.mxu0 %v2634
  %3175 = vmatprep.subr.mxu0 0.0
  %3176 = vmatpush1.msra.mxu0 %v2635
  %3177 = vmatprep.subr.mxu0 0.0
  %3178 = vmatpush1.msra.mxu0 %v2636
  %3179 = vmatprep.subr.mxu0 0.0
  %3180 = vmatpush1.msra.mxu0 %v2637
  %3181 = vmatprep.subr.mxu0 0.0
  %3182 = vmatpush1.msra.mxu0 %v2638
  %3183 = vmatprep.subr.mxu0 0.0
  %3184 = vmatpush1.msra.mxu0 %v2639
  %3185 = vmatprep.subr.mxu0 0.0
  %3186 = vmatpush1.msra.mxu0 %v2640
  %3187 = vmatprep.subr.mxu0 0.0
  %3188 = vmatpush1.msra.mxu0 %v2641
  %3189 = vmatprep.subr.mxu0 0.0
  %3190 = vmatpush1.msra.mxu0 %v2642
  %3191 = vmatprep.subr.mxu0 0.0
  %3192 = vmatpush1.msra.mxu0 %v2643
  %3193 = vmatprep.subr.mxu0 0.0
  %3194 = vmatpush1.msra.mxu0 %v2644
  %3195 = vmatprep.subr.mxu0 0.0
  %3196 = vmatpush1.msra.mxu0 %v2645
  %3197 = vmatprep.subr.mxu0 0.0
  %3198 = vmatpush1.msra.mxu0 %v2646
  %3199 = vmatprep.subr.mxu0 0.0
  %3200 = vmatpush1.msra.mxu0 %v2647
  %3201 = vmatprep.subr.mxu0 0.0
  %3202 = vmatpush1.msra.mxu0 %v2648
  %3203 = vmatprep.subr.mxu0 0.0
  %3204 = vmatpush1.msra.mxu0 %v2649
  %3205 = vmatprep.subr.mxu0 0.0
  %3206 = vmatpush1.msra.mxu0 %v2650
  %3207 = vmatprep.subr.mxu0 0.0
  %3208 = vmatpush1.msra.mxu0 %v2651
  %3209 = vmatprep.subr.mxu0 0.0
  %3210 = vmatpush1.msra.mxu0 %v2652
  %3211 = vmatprep.subr.mxu0 0.0
  %3212 = vmatpush1.msra.mxu0 %v2653
  %3213 = vmatprep.subr.mxu0 0.0
  %3214 = vmatpush1.msra.mxu0 %v2654
  %3215 = vmatprep.subr.mxu0 0.0
  %3216 = vmatpush1.msra.mxu0 %v2655
  %3217 = vmatprep.subr.mxu0 0.0
  %3218 = vmatpush1.msra.mxu0 %v2656
  %3219 = vmatprep.subr.mxu0 0.0
  %3220 = vmatpush1.msra.mxu0 %v2657
  %3221 = vmatprep.subr.mxu0 0.0
  %3222 = vmatpush1.msra.mxu0 %v2658
  %3223 = vmatprep.subr.mxu0 0.0
  %3224 = vmatpush1.msra.mxu0 %v2659
  %3225 = vmatprep.subr.mxu0 0.0
  %3226 = vmatpush1.msra.mxu0 %v2660
  %3227 = vmatprep.subr.mxu0 0.0
  %3228 = vmatpush1.msra.mxu0 %v2661
  %3229 = vmatprep.subr.mxu0 0.0
  %3230 = vmatpush1.msra.mxu0 %v2662
  %3231 = vmatprep.subr.mxu0 0.0
  %3232 = vmatpush1.msra.mxu0 %v2663
  %3233 = vmatprep.subr.mxu0 0.0
  %3234 = vmatpush1.msra.mxu0 %v2664
  %3235 = vmatprep.mubr.f32.mxu0 %v2680
  %3236 = vmatmul.mubr.f32.gmra.mrb[0].mxu0 %v2679
  %v3237 = vpop.f32.mrb[0].mxu0
  %v3238 = vadd.f32 %v3168, %v3237
  %v3239 = vpop.f32.mrb[0].mxu0
  %3240 = vdwg.mxu0
  %v3241 = vld [vmem:[%s4] sm:$0xff]
  %v3242 = vld [vmem:[%s4 + $0x8] sm:$0xff]
  %v3243 = vld [vmem:[%s4 + $0x10] sm:$0xff]
  %v3244 = vld [vmem:[%s4 + $0x18] sm:$0xff]
  %v3245 = vld [vmem:[%s4 + $0x20] sm:$0xff]
  %v3246 = vld [vmem:[%s4 + $0x28] sm:$0xff]
  %v3247 = vld [vmem:[%s4 + $0x30] sm:$0xff]
  %v3248 = vld [vmem:[%s4 + $0x38] sm:$0xff]
  %v3249 = vld [vmem:[%s4 + $0x40] sm:$0xff]
  %v3250 = vld [vmem:[%s4 + $0x48] sm:$0xff]
  %v3251 = vld [vmem:[%s4 + $0x50] sm:$0xff]
  %v3252 = vld [vmem:[%s4 + $0x58] sm:$0xff]
  %v3253 = vld [vmem:[%s4 + $0x60] sm:$0xff]
  %v3254 = vld [vmem:[%s4 + $0x68] sm:$0xff]
  %v3255 = vld [vmem:[%s4 + $0x70] sm:$0xff]
  %v3256 = vld [vmem:[%s4 + $0x78] sm:$0xff]
  %v3257 = vld [vmem:[%s5] sm:$0x1]
  %v3259 = vlaneseq
  %v3260 = vshrl.u32 %v3259, 7
  %v3261 = vsub.s32 0, %v3260
  %v3262 = vrot.slane %v3257, %v3261
  %3264 = vmatprep.subr.mxu0 0.0
  %3265 = vmatpush1.msra.mxu0 %v3241
  %3266 = vmatprep.subr.mxu0 0.0
  %3267 = vmatpush1.msra.mxu0 %v3242
  %3268 = vmatprep.subr.mxu0 0.0
  %3269 = vmatpush1.msra.mxu0 %v3243
  %3270 = vmatprep.subr.mxu0 0.0
  %3271 = vmatpush1.msra.mxu0 %v3244
  %3272 = vmatprep.subr.mxu0 0.0
  %3273 = vmatpush1.msra.mxu0 %v3245
  %3274 = vmatprep.subr.mxu0 0.0
  %3275 = vmatpush1.msra.mxu0 %v3246
  %3276 = vmatprep.subr.mxu0 0.0
  %3277 = vmatpush1.msra.mxu0 %v3247
  %3278 = vmatprep.subr.mxu0 0.0
  %3279 = vmatpush1.msra.mxu0 %v3248
  %3280 = vmatprep.subr.mxu0 0.0
  %3281 = vmatpush1.msra.mxu0 %v3249
  %3282 = vmatprep.subr.mxu0 0.0
  %3283 = vmatpush1.msra.mxu0 %v3250
  %3284 = vmatprep.subr.mxu0 0.0
  %3285 = vmatpush1.msra.mxu0 %v3251
  %3286 = vmatprep.subr.mxu0 0.0
  %3287 = vmatpush1.msra.mxu0 %v3252
  %3288 = vmatprep.subr.mxu0 0.0
  %3289 = vmatpush1.msra.mxu0 %v3253
  %3290 = vmatprep.subr.mxu0 0.0
  %3291 = vmatpush1.msra.mxu0 %v3254
  %3292 = vmatprep.subr.mxu0 0.0
  %3293 = vmatpush1.msra.mxu0 %v3255
  %3294 = vmatprep.subr.mxu0 0.0
  %3295 = vmatpush1.msra.mxu0 %v3256
  %3296 = vmatprep.subr.mxu0 0.0
  %3297 = vmatpush1.msra.mxu0 0.0
  %3298 = vmatprep.subr.mxu0 0.0
  %3299 = vmatpush1.msra.mxu0 0.0
  %3300 = vmatprep.subr.mxu0 0.0
  %3301 = vmatpush1.msra.mxu0 0.0
  %3302 = vmatprep.subr.mxu0 0.0
  %3303 = vmatpush1.msra.mxu0 0.0
  %3304 = vmatprep.subr.mxu0 0.0
  %3305 = vmatpush1.msra.mxu0 0.0
  %3306 = vmatprep.subr.mxu0 0.0
  %3307 = vmatpush1.msra.mxu0 0.0
  %3308 = vmatprep.subr.mxu0 0.0
  %3309 = vmatpush1.msra.mxu0 0.0
  %3310 = vmatprep.subr.mxu0 0.0
  %3311 = vmatpush1.msra.mxu0 0.0
  %3312 = vmatprep.subr.mxu0 0.0
  %3313 = vmatpush1.msra.mxu0 0.0
  %3314 = vmatprep.subr.mxu0 0.0
  %3315 = vmatpush1.msra.mxu0 0.0
  %3316 = vmatprep.subr.mxu0 0.0
  %3317 = vmatpush1.msra.mxu0 0.0
  %3318 = vmatprep.subr.mxu0 0.0
  %3319 = vmatpush1.msra.mxu0 0.0
  %3320 = vmatprep.subr.mxu0 0.0
  %3321 = vmatpush1.msra.mxu0 0.0
  %3322 = vmatprep.subr.mxu0 0.0
  %3323 = vmatpush1.msra.mxu0 0.0
  %3324 = vmatprep.subr.mxu0 0.0
  %3325 = vmatpush1.msra.mxu0 0.0
  %3326 = vmatprep.subr.mxu0 0.0
  %3327 = vmatpush1.msra.mxu0 0.0
  %3328 = vmatprep.mubr.f32.mxu0 0.0
  %3329 = vmatmul.mubr.f32.gmra.mrb[0].mxu0 %v3238
  %v3330 = vpop.f32.mrb[0].mxu0
  %v3331 = vadd.f32 %v3262, %v3330
  %v3332 = vpop.f32.mrb[0].mxu0
  %3333 = vdwg.mxu0
  %3334 = vst [vmem:[%s6] sm:$0xff] %v3331
  // Predicated region
  $region26: #{deep_classifier_forward.1} parent=0 // pred_check
    _
  $region27: #{deep_classifier_forward.1} parent=0 // pred_check_branch
    %3336 = sbr.rel (0) target = $region29
  $region28: #{deep_classifier_forward.1} parent=0 // pred_region
    _
  $region29: #{deep_classifier_forward.1} parent=0 // pred_fallthru
    _
  // Predicated region
  $region30: #{deep_classifier_forward.1} parent=0 // pred_check
    _
  $region31: #{deep_classifier_forward.1} parent=0 // pred_check_branch
    %3338 = sbr.rel (0) target = $region33
  $region32: #{deep_classifier_forward.1} parent=0 // pred_region
    _
  $region33: #{deep_classifier_forward.1} parent=0 // pred_fallthru
    _

</llo_original>
